<compile_context>
chip_gen: v5e
topology: v5e:2x2
jax: 0.10.0
libtpu: 0.0.40
codegen_flags: <defaults>
</compile_context>

<pallas_src>
import functools
import math

import jax
import jax.numpy as jnp
from jax.experimental import pallas as pl
from jax.experimental.pallas import tpu as pltpu

EPS = 1e-6
_VMEM_LIMIT = 32 * 1024 * 1024   # safe across v5e / v6e / v7x; usage here is tiny


# ----------------------------- Pallas kernel --------------------------------

def _layernorm(x, g, b):
    """Torch-style LayerNorm of the Annotated Transformer (unbiased std, /(std+eps))."""
    d = x.shape[-1]
    mean = jnp.mean(x, axis=-1, keepdims=True)
    diff = x - mean
    var = jnp.sum(diff * diff, axis=-1, keepdims=True) / (d - 1)
    return g * diff / (jnp.sqrt(var) + EPS) + b


def encoder_layer_kernel(x_ref, img_ref, mask_ref,
                         ln1g_ref, ln1b_ref,
                         wq_ref, bq_ref, wk_ref, bk_ref, wv_ref, bv_ref,
                         wo_ref, bo_ref,
                         ln2g_ref, ln2b_ref,
                         w1_ref, b1_ref, w2_ref, b2_ref,
                         o_ref, k_scr, v_scr, *, num_heads):
    """Fused EncoderLayer: (LN + MHA + residual) then (LN + FFN + residual).

    One grid step = one batch element.  All intermediates live in VMEM.
    """
    x = x_ref[0]            # [S, D]      (residual, un-normed tokens)
    img = img_ref[0]        # [S_img, D]  (raw image features, NOT normed)
    m = mask_ref[0]         # [S, S_kv]   (1.0 attend / 0.0 masked; image cols = 1)
    S, D = x.shape
    S_img = img.shape[0]
    S_kv = S + S_img
    dk = D // num_heads
    scale = 1.0 / math.sqrt(dk)

    # ---------------- sublayer 0: x + MHA(LN(x), [LN(x); img], mask) --------
    xn = _layernorm(x, ln1g_ref[...], ln1b_ref[...])

    # Q/K/V projections — lane-dense (N = D) matmuls.  K/V memory = [xn ; img],
    # assembled in VMEM scratch instead of an HBM concat.  Attention scale is
    # folded into Q once (not per-head on the score block).
    q = (jnp.dot(xn, wq_ref[...], preferred_element_type=jnp.float32)
         + bq_ref[...]) * scale
    wk = wk_ref[...]
    bk = bk_ref[...]
    wv = wv_ref[...]
    bv = bv_ref[...]
    k_scr[0:S, :] = jnp.dot(xn, wk, preferred_element_type=jnp.float32) + bk
    k_scr[S:S_kv, :] = jnp.dot(img, wk, preferred_element_type=jnp.float32) + bk
    v_scr[0:S, :] = jnp.dot(xn, wv, preferred_element_type=jnp.float32) + bv
    v_scr[S:S_kv, :] = jnp.dot(img, wv, preferred_element_type=jnp.float32) + bv
    k = k_scr[...]          # [S_kv, D]
    v = v_scr[...]          # [S_kv, D]

    # Additive mask bias, computed once (no per-head broadcast).
    bias = jnp.where(m == 0.0, jnp.float32(-1e9), jnp.float32(0.0))   # [S, S_kv]

    # Per-head attention; the output projection is folded per head so the
    # accumulated result stays lane-dense [S, D] (no [S, dk] stores, no concat).
    wo = wo_ref[...]
    proj = jnp.zeros((S, D), jnp.float32)
    for h in range(num_heads):                 # static unrolled loop
        lo, hi = h * dk, (h + 1) * dk
        qh = q[:, lo:hi]                       # [S, dk]   (already scaled)
        kh = k[:, lo:hi]                       # [S_kv, dk]
        vh = v[:, lo:hi]                       # [S_kv, dk]
        sc = jax.lax.dot_general(qh, kh, (((1,), (1,)), ((), ())),
                                 preferred_element_type=jnp.float32) + bias
        sc = sc - jnp.max(sc, axis=-1, keepdims=True)
        p = jnp.exp(sc)                                                 # [S, S_kv]
        inv = pl.reciprocal(jnp.sum(p, axis=-1, keepdims=True), approx=True)
        # normalize the small [S, dk] head output instead of the [S, S_kv] probs
        oh = jnp.dot(p, vh, preferred_element_type=jnp.float32) * inv   # [S, dk]
        proj = proj + jnp.dot(oh, wo[lo:hi, :],
                              preferred_element_type=jnp.float32)       # [S, D]

    y = x + proj + bo_ref[...]                 # residual add (dropout = identity)

    # ---------------- sublayer 1: y + FFN(LN(y)) -----------------------------
    yn = _layernorm(y, ln2g_ref[...], ln2b_ref[...])
    hid = jnp.dot(yn, w1_ref[...], preferred_element_type=jnp.float32) + b1_ref[...]
    hid = jnp.maximum(hid, 0.0)
    o_ref[0] = y + jnp.dot(hid, w2_ref[...],
                           preferred_element_type=jnp.float32) + b2_ref[...]


# ------------------------------ wrapper --------------------------------------

def encoder_layer_forward(x, image_feat, mask, p, num_heads):
    B, S, D = x.shape
    S_img = image_feat.shape[1]
    S_kv = S + S_img
    DFF = p["w1"].shape[1]

    # Single small mask pad (image positions always visible); no per-head broadcast.
    mask_full = jnp.concatenate(
        [mask, jnp.ones((B, S, S_img), mask.dtype)], axis=-1)          # [B, S, S_kv]

    kernel = functools.partial(encoder_layer_kernel, num_heads=num_heads)
    const = lambda b: (0, 0)
    return pl.pallas_call(
        kernel,
        out_shape=jax.ShapeDtypeStruct((B, S, D), jnp.float32),
        grid=(B,),
        in_specs=[
            pl.BlockSpec((1, S, D), lambda b: (b, 0, 0)),        # x (residual)
            pl.BlockSpec((1, S_img, D), lambda b: (b, 0, 0)),    # image_feat
            pl.BlockSpec((1, S, S_kv), lambda b: (b, 0, 0)),     # mask (padded)
            pl.BlockSpec((1, D), const), pl.BlockSpec((1, D), const),     # ln1 g, b
            pl.BlockSpec((D, D), const), pl.BlockSpec((1, D), const),     # wq, bq
            pl.BlockSpec((D, D), const), pl.BlockSpec((1, D), const),     # wk, bk
            pl.BlockSpec((D, D), const), pl.BlockSpec((1, D), const),     # wv, bv
            pl.BlockSpec((D, D), const), pl.BlockSpec((1, D), const),     # wo, bo
            pl.BlockSpec((1, D), const), pl.BlockSpec((1, D), const),     # ln2 g, b
            pl.BlockSpec((D, DFF), const), pl.BlockSpec((1, DFF), const), # w1, b1
            pl.BlockSpec((DFF, D), const), pl.BlockSpec((1, D), const),   # w2, b2
        ],
        out_specs=pl.BlockSpec((1, S, D), lambda b: (b, 0, 0)),
        scratch_shapes=[pltpu.VMEM((S_kv, D), jnp.float32),      # K memory
                        pltpu.VMEM((S_kv, D), jnp.float32)],     # V memory
        compiler_params=pltpu.CompilerParams(
            dimension_semantics=("parallel",),
            vmem_limit_bytes=_VMEM_LIMIT),
    )(x, image_feat, mask_full,
      p["ln1_g"].reshape(1, D), p["ln1_b"].reshape(1, D),
      p["wq"], p["bq"].reshape(1, D),
      p["wk"], p["bk"].reshape(1, D),
      p["wv"], p["bv"].reshape(1, D),
      p["wo"], p["bo"].reshape(1, D),
      p["ln2_g"].reshape(1, D), p["ln2_b"].reshape(1, D),
      p["w1"], p["b1"].reshape(1, DFF),
      p["w2"], p["b2"].reshape(1, D))


# ------------------------- pure-JAX reference -------------------------------

def _ref_layernorm(x, g, b):
    mean = x.mean(-1, keepdims=True)
    std = jnp.sqrt(((x - mean) ** 2).sum(-1, keepdims=True) / (x.shape[-1] - 1))
    return g * (x - mean) / (std + EPS) + b


def _ref_forward(x, image_feat, mask, p, H):
    B, S, D = x.shape
    dk = D // H
    S_img = image_feat.shape[1]
    S_kv = S + S_img

    def mha(xn, res):
        kv = jnp.concatenate([xn, image_feat], axis=1)
        q = (xn @ p["wq"] + p["bq"]).reshape(B, S, H, dk).transpose(0, 2, 1, 3)
        k = (kv @ p["wk"] + p["bk"]).reshape(B, S_kv, H, dk).transpose(0, 2, 1, 3)
        v = (kv @ p["wv"] + p["bv"]).reshape(B, S_kv, H, dk).transpose(0, 2, 1, 3)
        m = jnp.concatenate([mask, jnp.ones((B, S, S_img), mask.dtype)], -1)[:, None]
        sc = jnp.einsum("bhqd,bhkd->bhqk", q, k) / math.sqrt(dk)
        sc = jnp.where(m == 0.0, -1e9, sc)
        pr = jax.nn.softmax(sc, axis=-1)
        o = jnp.einsum("bhqk,bhkd->bhqd", pr, v).transpose(0, 2, 1, 3).reshape(B, S, D)
        return res + o @ p["wo"] + p["bo"]

    xn = _ref_layernorm(x, p["ln1_g"], p["ln1_b"])
    y = mha(xn, x)
    yn = _ref_layernorm(y, p["ln2_g"], p["ln2_b"])
    return y + jnp.maximum(yn @ p["w1"] + p["b1"], 0.0) @ p["w2"] + p["b2"]


# ---------------------------------- main -------------------------------------

if __name__ == "__main__":
    B, S, D, H, D_FF, S_IMG = 2, 8, 32, 4, 64, 4

    key = jax.random.PRNGKey(0)
    ks = jax.random.split(key, 16)

    def w(k, shape):
        return (0.02 * jax.random.normal(k, shape)).astype(jnp.float32)

    params = {
        "wq": w(ks[0], (D, D)), "bq": jnp.zeros((D,), jnp.float32),
        "wk": w(ks[1], (D, D)), "bk": jnp.zeros((D,), jnp.float32),
        "wv": w(ks[2], (D, D)), "bv": jnp.zeros((D,), jnp.float32),
        "wo": w(ks[3], (D, D)), "bo": jnp.zeros((D,), jnp.float32),
        "w1": w(ks[4], (D, D_FF)), "b1": jnp.zeros((D_FF,), jnp.float32),
        "w2": w(ks[5], (D_FF, D)), "b2": jnp.zeros((D,), jnp.float32),
        "ln1_g": jnp.ones((D,), jnp.float32), "ln1_b": jnp.zeros((D,), jnp.float32),
        "ln2_g": jnp.ones((D,), jnp.float32), "ln2_b": jnp.zeros((D,), jnp.float32),
    }

    x = jax.random.normal(ks[6], (B, S, D), jnp.float32)
    image_feat = jax.random.normal(ks[7], (B, S_IMG, D), jnp.float32)
    # padding-style mask: last two positions of batch 1 are masked out
    mask = jnp.ones((B, S, S), jnp.float32).at[1, :, S - 2:].set(0.0)

    out = encoder_layer_forward(x, image_feat, mask, params, H)
    out = jax.block_until_ready(out)

    ref = _ref_forward(x, image_feat, mask, params, H)
    assert out.shape == (B, S, D)
    assert jnp.allclose(out, ref, atol=1e-3, rtol=1e-3), "mismatch vs reference"

    print("KERNEL_OK")
</pallas_src>

<mosaic_0001>
module attributes {stable_mosaic.version = 11 : i64} {
  func.func @encoder_layer_kernel(%arg0: i32, %arg1: memref<1x8x32xf32, #tpu.memory_space<vmem>>, %arg2: memref<1x4x32xf32, #tpu.memory_space<vmem>>, %arg3: memref<1x8x12xf32, #tpu.memory_space<vmem>>, %arg4: memref<1x32xf32, #tpu.memory_space<vmem>>, %arg5: memref<1x32xf32, #tpu.memory_space<vmem>>, %arg6: memref<32x32xf32, #tpu.memory_space<vmem>>, %arg7: memref<1x32xf32, #tpu.memory_space<vmem>>, %arg8: memref<32x32xf32, #tpu.memory_space<vmem>>, %arg9: memref<1x32xf32, #tpu.memory_space<vmem>>, %arg10: memref<32x32xf32, #tpu.memory_space<vmem>>, %arg11: memref<1x32xf32, #tpu.memory_space<vmem>>, %arg12: memref<32x32xf32, #tpu.memory_space<vmem>>, %arg13: memref<1x32xf32, #tpu.memory_space<vmem>>, %arg14: memref<1x32xf32, #tpu.memory_space<vmem>>, %arg15: memref<1x32xf32, #tpu.memory_space<vmem>>, %arg16: memref<32x64xf32, #tpu.memory_space<vmem>>, %arg17: memref<1x64xf32, #tpu.memory_space<vmem>>, %arg18: memref<64x32xf32, #tpu.memory_space<vmem>>, %arg19: memref<1x32xf32, #tpu.memory_space<vmem>>, %arg20: memref<1x8x32xf32, #tpu.memory_space<vmem>>, %arg21: memref<12x32xf32, #tpu.memory_space<vmem>>, %arg22: memref<12x32xf32, #tpu.memory_space<vmem>>) attributes {dimension_semantics = [#tpu.dimension_semantics<parallel>], iteration_bounds = array<i64: 2>, scalar_prefetch = 0 : i64, scratch_operands = 2 : i64, tpu.core_type = #tpu.core_type<tc>, window_params = [{transform_indices = @transform_0, window_bounds = array<i64: 1, 8, 32>}, {transform_indices = @transform_1, window_bounds = array<i64: 1, 4, 32>}, {transform_indices = @transform_2, window_bounds = array<i64: 1, 8, 12>}, {pipeline_mode = #tpu.pipeline_mode<synchronous>, transform_indices = @transform_3, window_bounds = array<i64: 1, 32>}, {pipeline_mode = #tpu.pipeline_mode<synchronous>, transform_indices = @transform_4, window_bounds = array<i64: 1, 32>}, {pipeline_mode = #tpu.pipeline_mode<synchronous>, transform_indices = @transform_5, window_bounds = array<i64: 32, 32>}, {pipeline_mode = #tpu.pipeline_mode<synchronous>, transform_indices = @transform_6, window_bounds = array<i64: 1, 32>}, {pipeline_mode = #tpu.pipeline_mode<synchronous>, transform_indices = @transform_7, window_bounds = array<i64: 32, 32>}, {pipeline_mode = #tpu.pipeline_mode<synchronous>, transform_indices = @transform_8, window_bounds = array<i64: 1, 32>}, {pipeline_mode = #tpu.pipeline_mode<synchronous>, transform_indices = @transform_9, window_bounds = array<i64: 32, 32>}, {pipeline_mode = #tpu.pipeline_mode<synchronous>, transform_indices = @transform_10, window_bounds = array<i64: 1, 32>}, {pipeline_mode = #tpu.pipeline_mode<synchronous>, transform_indices = @transform_11, window_bounds = array<i64: 32, 32>}, {pipeline_mode = #tpu.pipeline_mode<synchronous>, transform_indices = @transform_12, window_bounds = array<i64: 1, 32>}, {pipeline_mode = #tpu.pipeline_mode<synchronous>, transform_indices = @transform_13, window_bounds = array<i64: 1, 32>}, {pipeline_mode = #tpu.pipeline_mode<synchronous>, transform_indices = @transform_14, window_bounds = array<i64: 1, 32>}, {pipeline_mode = #tpu.pipeline_mode<synchronous>, transform_indices = @transform_15, window_bounds = array<i64: 32, 64>}, {pipeline_mode = #tpu.pipeline_mode<synchronous>, transform_indices = @transform_16, window_bounds = array<i64: 1, 64>}, {pipeline_mode = #tpu.pipeline_mode<synchronous>, transform_indices = @transform_17, window_bounds = array<i64: 64, 32>}, {pipeline_mode = #tpu.pipeline_mode<synchronous>, transform_indices = @transform_18, window_bounds = array<i64: 1, 32>}, {transform_indices = @transform_19, window_bounds = array<i64: 1, 8, 32>}]} {
    %c0 = arith.constant 0 : index
    %c0_0 = arith.constant 0 : index
    %c0_1 = arith.constant 0 : index
    %0 = vector.load %arg1[%c0, %c0_0, %c0_1] : memref<1x8x32xf32, #tpu.memory_space<vmem>>, vector<1x8x32xf32>
    %1 = vector.shape_cast %0 : vector<1x8x32xf32> to vector<8x32xf32>
    %c0_2 = arith.constant 0 : index
    %c0_3 = arith.constant 0 : index
    %c0_4 = arith.constant 0 : index
    %2 = vector.load %arg2[%c0_2, %c0_3, %c0_4] : memref<1x4x32xf32, #tpu.memory_space<vmem>>, vector<1x4x32xf32>
    %3 = vector.shape_cast %2 : vector<1x4x32xf32> to vector<4x32xf32>
    %c0_5 = arith.constant 0 : index
    %c0_6 = arith.constant 0 : index
    %c0_7 = arith.constant 0 : index
    %4 = vector.load %arg3[%c0_5, %c0_6, %c0_7] : memref<1x8x12xf32, #tpu.memory_space<vmem>>, vector<1x8x12xf32>
    %5 = vector.shape_cast %4 : vector<1x8x12xf32> to vector<8x12xf32>
    %c0_8 = arith.constant 0 : index
    %c0_9 = arith.constant 0 : index
    %6 = vector.load %arg4[%c0_8, %c0_9] : memref<1x32xf32, #tpu.memory_space<vmem>>, vector<1x32xf32>
    %c0_10 = arith.constant 0 : index
    %c0_11 = arith.constant 0 : index
    %7 = vector.load %arg5[%c0_10, %c0_11] : memref<1x32xf32, #tpu.memory_space<vmem>>, vector<1x32xf32>
    %cst = arith.constant dense<0.000000e+00> : vector<8xf32>
    %8 = vector.multi_reduction <add>, %1, %cst [1] : vector<8x32xf32> to vector<8xf32>
    %9 = vector.shape_cast %8 : vector<8xf32> to vector<8x1xf32>
    %cst_12 = arith.constant 3.200000e+01 : f32
    %10 = vector.broadcast %cst_12 : f32 to vector<8x1xf32>
    %11 = arith.divf %9, %10 : vector<8x1xf32>
    %12 = vector.broadcast %11 : vector<8x1xf32> to vector<8x32xf32>
    %13 = arith.subf %1, %12 : vector<8x32xf32>
    %14 = arith.mulf %13, %13 : vector<8x32xf32>
    %cst_13 = arith.constant dense<0.000000e+00> : vector<8xf32>
    %15 = vector.multi_reduction <add>, %14, %cst_13 [1] : vector<8x32xf32> to vector<8xf32>
    %16 = vector.shape_cast %15 : vector<8xf32> to vector<8x1xf32>
    %cst_14 = arith.constant 3.100000e+01 : f32
    %17 = vector.broadcast %cst_14 : f32 to vector<8x1xf32>
    %18 = arith.divf %16, %17 : vector<8x1xf32>
    %19 = vector.broadcast %6 : vector<1x32xf32> to vector<8x32xf32>
    %20 = arith.mulf %19, %13 : vector<8x32xf32>
    %21 = math.sqrt %18 : vector<8x1xf32>
    %cst_15 = arith.constant 9.99999997E-7 : f32
    %22 = vector.broadcast %cst_15 : f32 to vector<8x1xf32>
    %23 = arith.addf %21, %22 : vector<8x1xf32>
    %24 = vector.broadcast %23 : vector<8x1xf32> to vector<8x32xf32>
    %25 = arith.divf %20, %24 : vector<8x32xf32>
    %26 = vector.broadcast %7 : vector<1x32xf32> to vector<8x32xf32>
    %27 = arith.addf %25, %26 : vector<8x32xf32>
    %c0_16 = arith.constant 0 : index
    %c0_17 = arith.constant 0 : index
    %28 = vector.load %arg6[%c0_16, %c0_17] : memref<32x32xf32, #tpu.memory_space<vmem>>, vector<32x32xf32>
    %cst_18 = arith.constant dense<0.000000e+00> : vector<8x32xf32>
    %29 = tpu.matmul %27, %28, %cst_18 {dimension_numbers = #tpu.dot_dimension_numbers<[1], [0], [0], [1], [0, 0, 1, 1], [], []>} : vector<8x32xf32>, vector<32x32xf32>, vector<8x32xf32> -> vector<8x32xf32>
    %c0_19 = arith.constant 0 : index
    %c0_20 = arith.constant 0 : index
    %30 = vector.load %arg7[%c0_19, %c0_20] : memref<1x32xf32, #tpu.memory_space<vmem>>, vector<1x32xf32>
    %31 = vector.broadcast %30 : vector<1x32xf32> to vector<8x32xf32>
    %32 = arith.addf %29, %31 : vector<8x32xf32>
    %cst_21 = arith.constant 0.353553385 : f32
    %33 = vector.broadcast %cst_21 : f32 to vector<8x32xf32>
    %34 = arith.mulf %32, %33 : vector<8x32xf32>
    %c0_22 = arith.constant 0 : index
    %c0_23 = arith.constant 0 : index
    %35 = vector.load %arg8[%c0_22, %c0_23] : memref<32x32xf32, #tpu.memory_space<vmem>>, vector<32x32xf32>
    %c0_24 = arith.constant 0 : index
    %c0_25 = arith.constant 0 : index
    %36 = vector.load %arg9[%c0_24, %c0_25] : memref<1x32xf32, #tpu.memory_space<vmem>>, vector<1x32xf32>
    %c0_26 = arith.constant 0 : index
    %c0_27 = arith.constant 0 : index
    %37 = vector.load %arg10[%c0_26, %c0_27] : memref<32x32xf32, #tpu.memory_space<vmem>>, vector<32x32xf32>
    %c0_28 = arith.constant 0 : index
    %c0_29 = arith.constant 0 : index
    %38 = vector.load %arg11[%c0_28, %c0_29] : memref<1x32xf32, #tpu.memory_space<vmem>>, vector<1x32xf32>
    %cst_30 = arith.constant dense<0.000000e+00> : vector<8x32xf32>
    %39 = tpu.matmul %27, %35, %cst_30 {dimension_numbers = #tpu.dot_dimension_numbers<[1], [0], [0], [1], [0, 0, 1, 1], [], []>} : vector<8x32xf32>, vector<32x32xf32>, vector<8x32xf32> -> vector<8x32xf32>
    %40 = vector.broadcast %36 : vector<1x32xf32> to vector<8x32xf32>
    %41 = arith.addf %39, %40 : vector<8x32xf32>
    %c0_31 = arith.constant 0 : index
    %c0_32 = arith.constant 0 : index
    %42 = vector.load %arg21[%c0_31, %c0_32] : memref<12x32xf32, #tpu.memory_space<vmem>>, vector<8x32xf32>
    tpu.vector_store %arg21[%c0_31, %c0_32], %41 {strides = array<i32>} : memref<12x32xf32, #tpu.memory_space<vmem>>, vector<8x32xf32>,
    %cst_33 = arith.constant dense<0.000000e+00> : vector<4x32xf32>
    %43 = tpu.matmul %3, %35, %cst_33 {dimension_numbers = #tpu.dot_dimension_numbers<[1], [0], [0], [1], [0, 0, 1, 1], [], []>} : vector<4x32xf32>, vector<32x32xf32>, vector<4x32xf32> -> vector<4x32xf32>
    %44 = vector.broadcast %36 : vector<1x32xf32> to vector<4x32xf32>
    %45 = arith.addf %43, %44 : vector<4x32xf32>
    %c8 = arith.constant 8 : index
    %c0_34 = arith.constant 0 : index
    %46 = vector.load %arg21[%c8, %c0_34] : memref<12x32xf32, #tpu.memory_space<vmem>>, vector<4x32xf32>
    tpu.vector_store %arg21[%c8, %c0_34], %45 {strides = array<i32>} : memref<12x32xf32, #tpu.memory_space<vmem>>, vector<4x32xf32>,
    %cst_35 = arith.constant dense<0.000000e+00> : vector<8x32xf32>
    %47 = tpu.matmul %27, %37, %cst_35 {dimension_numbers = #tpu.dot_dimension_numbers<[1], [0], [0], [1], [0, 0, 1, 1], [], []>} : vector<8x32xf32>, vector<32x32xf32>, vector<8x32xf32> -> vector<8x32xf32>
    %48 = vector.broadcast %38 : vector<1x32xf32> to vector<8x32xf32>
    %49 = arith.addf %47, %48 : vector<8x32xf32>
    %c0_36 = arith.constant 0 : index
    %c0_37 = arith.constant 0 : index
    %50 = vector.load %arg22[%c0_36, %c0_37] : memref<12x32xf32, #tpu.memory_space<vmem>>, vector<8x32xf32>
    tpu.vector_store %arg22[%c0_36, %c0_37], %49 {strides = array<i32>} : memref<12x32xf32, #tpu.memory_space<vmem>>, vector<8x32xf32>,
    %cst_38 = arith.constant dense<0.000000e+00> : vector<4x32xf32>
    %51 = tpu.matmul %3, %37, %cst_38 {dimension_numbers = #tpu.dot_dimension_numbers<[1], [0], [0], [1], [0, 0, 1, 1], [], []>} : vector<4x32xf32>, vector<32x32xf32>, vector<4x32xf32> -> vector<4x32xf32>
    %52 = vector.broadcast %38 : vector<1x32xf32> to vector<4x32xf32>
    %53 = arith.addf %51, %52 : vector<4x32xf32>
    %c8_39 = arith.constant 8 : index
    %c0_40 = arith.constant 0 : index
    %54 = vector.load %arg22[%c8_39, %c0_40] : memref<12x32xf32, #tpu.memory_space<vmem>>, vector<4x32xf32>
    tpu.vector_store %arg22[%c8_39, %c0_40], %53 {strides = array<i32>} : memref<12x32xf32, #tpu.memory_space<vmem>>, vector<4x32xf32>,
    %c0_41 = arith.constant 0 : index
    %c0_42 = arith.constant 0 : index
    %55 = vector.load %arg21[%c0_41, %c0_42] : memref<12x32xf32, #tpu.memory_space<vmem>>, vector<12x32xf32>
    %c0_43 = arith.constant 0 : index
    %c0_44 = arith.constant 0 : index
    %56 = vector.load %arg22[%c0_43, %c0_44] : memref<12x32xf32, #tpu.memory_space<vmem>>, vector<12x32xf32>
    %cst_45 = arith.constant 0.000000e+00 : f32
    %57 = vector.broadcast %cst_45 : f32 to vector<8x12xf32>
    %58 = arith.cmpf oeq, %5, %57 : vector<8x12xf32>
    %cst_46 = arith.constant -1.000000e+09 : f32
    %cst_47 = arith.constant 0.000000e+00 : f32
    %59 = vector.broadcast %cst_46 : f32 to vector<8x12xf32>
    %60 = vector.broadcast %cst_47 : f32 to vector<8x12xf32>
    %61 = arith.select %58, %59, %60 : vector<8x12xi1>, vector<8x12xf32>
    %c0_48 = arith.constant 0 : index
    %c0_49 = arith.constant 0 : index
    %62 = vector.load %arg12[%c0_48, %c0_49] : memref<32x32xf32, #tpu.memory_space<vmem>>, vector<32x32xf32>
    %cst_50 = arith.constant 0.000000e+00 : f32
    %63 = vector.broadcast %cst_50 : f32 to vector<8x32xf32>
    %64 = vector.extract_strided_slice %34 {offsets = [0, 0], sizes = [8, 8], strides = [1, 1]} : vector<8x32xf32> to vector<8x8xf32>
    %65 = vector.extract_strided_slice %55 {offsets = [0, 0], sizes = [12, 8], strides = [1, 1]} : vector<12x32xf32> to vector<12x8xf32>
    %66 = vector.extract_strided_slice %56 {offsets = [0, 0], sizes = [12, 8], strides = [1, 1]} : vector<12x32xf32> to vector<12x8xf32>
    %cst_51 = arith.constant dense<0.000000e+00> : vector<8x12xf32>
    %67 = tpu.matmul %64, %65, %cst_51 {dimension_numbers = #tpu.dot_dimension_numbers<[1], [1], [0], [0], [0, 0, 1, 0], [], []>} : vector<8x8xf32>, vector<12x8xf32>, vector<8x12xf32> -> vector<8x12xf32>
    %68 = arith.addf %67, %61 : vector<8x12xf32>
    %cst_52 = arith.constant dense<0xFF800000> : vector<8xf32>
    %69 = vector.multi_reduction <maximumf>, %68, %cst_52 [1] : vector<8x12xf32> to vector<8xf32>
    %70 = vector.shape_cast %69 : vector<8xf32> to vector<8x1xf32>
    %71 = vector.broadcast %70 : vector<8x1xf32> to vector<8x12xf32>
    %72 = arith.subf %68, %71 : vector<8x12xf32>
    %73 = math.exp %72 : vector<8x12xf32>
    %cst_53 = arith.constant dense<0.000000e+00> : vector<8xf32>
    %74 = vector.multi_reduction <add>, %73, %cst_53 [1] : vector<8x12xf32> to vector<8xf32>
    %75 = vector.shape_cast %74 : vector<8xf32> to vector<8x1xf32>
    %76 = tpu.reciprocal %75 {approx = true} : vector<8x1xf32> -> vector<8x1xf32>
    %cst_54 = arith.constant dense<0.000000e+00> : vector<8x8xf32>
    %77 = tpu.matmul %73, %66, %cst_54 {dimension_numbers = #tpu.dot_dimension_numbers<[1], [0], [0], [1], [0, 0, 1, 1], [], []>} : vector<8x12xf32>, vector<12x8xf32>, vector<8x8xf32> -> vector<8x8xf32>
    %78 = vector.broadcast %76 : vector<8x1xf32> to vector<8x8xf32>
    %79 = arith.mulf %77, %78 : vector<8x8xf32>
    %80 = vector.extract_strided_slice %62 {offsets = [0, 0], sizes = [8, 32], strides = [1, 1]} : vector<32x32xf32> to vector<8x32xf32>
    %cst_55 = arith.constant dense<0.000000e+00> : vector<8x32xf32>
    %81 = tpu.matmul %79, %80, %cst_55 {dimension_numbers = #tpu.dot_dimension_numbers<[1], [0], [0], [1], [0, 0, 1, 1], [], []>} : vector<8x8xf32>, vector<8x32xf32>, vector<8x32xf32> -> vector<8x32xf32>
    %82 = arith.addf %63, %81 : vector<8x32xf32>
    %83 = vector.extract_strided_slice %34 {offsets = [0, 8], sizes = [8, 8], strides = [1, 1]} : vector<8x32xf32> to vector<8x8xf32>
    %84 = vector.extract_strided_slice %55 {offsets = [0, 8], sizes = [12, 8], strides = [1, 1]} : vector<12x32xf32> to vector<12x8xf32>
    %85 = vector.extract_strided_slice %56 {offsets = [0, 8], sizes = [12, 8], strides = [1, 1]} : vector<12x32xf32> to vector<12x8xf32>
    %cst_56 = arith.constant dense<0.000000e+00> : vector<8x12xf32>
    %86 = tpu.matmul %83, %84, %cst_56 {dimension_numbers = #tpu.dot_dimension_numbers<[1], [1], [0], [0], [0, 0, 1, 0], [], []>} : vector<8x8xf32>, vector<12x8xf32>, vector<8x12xf32> -> vector<8x12xf32>
    %87 = arith.addf %86, %61 : vector<8x12xf32>
    %cst_57 = arith.constant dense<0xFF800000> : vector<8xf32>
    %88 = vector.multi_reduction <maximumf>, %87, %cst_57 [1] : vector<8x12xf32> to vector<8xf32>
    %89 = vector.shape_cast %88 : vector<8xf32> to vector<8x1xf32>
    %90 = vector.broadcast %89 : vector<8x1xf32> to vector<8x12xf32>
    %91 = arith.subf %87, %90 : vector<8x12xf32>
    %92 = math.exp %91 : vector<8x12xf32>
    %cst_58 = arith.constant dense<0.000000e+00> : vector<8xf32>
    %93 = vector.multi_reduction <add>, %92, %cst_58 [1] : vector<8x12xf32> to vector<8xf32>
    %94 = vector.shape_cast %93 : vector<8xf32> to vector<8x1xf32>
    %95 = tpu.reciprocal %94 {approx = true} : vector<8x1xf32> -> vector<8x1xf32>
    %cst_59 = arith.constant dense<0.000000e+00> : vector<8x8xf32>
    %96 = tpu.matmul %92, %85, %cst_59 {dimension_numbers = #tpu.dot_dimension_numbers<[1], [0], [0], [1], [0, 0, 1, 1], [], []>} : vector<8x12xf32>, vector<12x8xf32>, vector<8x8xf32> -> vector<8x8xf32>
    %97 = vector.broadcast %95 : vector<8x1xf32> to vector<8x8xf32>
    %98 = arith.mulf %96, %97 : vector<8x8xf32>
    %99 = vector.extract_strided_slice %62 {offsets = [8, 0], sizes = [8, 32], strides = [1, 1]} : vector<32x32xf32> to vector<8x32xf32>
    %cst_60 = arith.constant dense<0.000000e+00> : vector<8x32xf32>
    %100 = tpu.matmul %98, %99, %cst_60 {dimension_numbers = #tpu.dot_dimension_numbers<[1], [0], [0], [1], [0, 0, 1, 1], [], []>} : vector<8x8xf32>, vector<8x32xf32>, vector<8x32xf32> -> vector<8x32xf32>
    %101 = arith.addf %82, %100 : vector<8x32xf32>
    %102 = vector.extract_strided_slice %34 {offsets = [0, 16], sizes = [8, 8], strides = [1, 1]} : vector<8x32xf32> to vector<8x8xf32>
    %103 = vector.extract_strided_slice %55 {offsets = [0, 16], sizes = [12, 8], strides = [1, 1]} : vector<12x32xf32> to vector<12x8xf32>
    %104 = vector.extract_strided_slice %56 {offsets = [0, 16], sizes = [12, 8], strides = [1, 1]} : vector<12x32xf32> to vector<12x8xf32>
    %cst_61 = arith.constant dense<0.000000e+00> : vector<8x12xf32>
    %105 = tpu.matmul %102, %103, %cst_61 {dimension_numbers = #tpu.dot_dimension_numbers<[1], [1], [0], [0], [0, 0, 1, 0], [], []>} : vector<8x8xf32>, vector<12x8xf32>, vector<8x12xf32> -> vector<8x12xf32>
    %106 = arith.addf %105, %61 : vector<8x12xf32>
    %cst_62 = arith.constant dense<0xFF800000> : vector<8xf32>
    %107 = vector.multi_reduction <maximumf>, %106, %cst_62 [1] : vector<8x12xf32> to vector<8xf32>
    %108 = vector.shape_cast %107 : vector<8xf32> to vector<8x1xf32>
    %109 = vector.broadcast %108 : vector<8x1xf32> to vector<8x12xf32>
    %110 = arith.subf %106, %109 : vector<8x12xf32>
    %111 = math.exp %110 : vector<8x12xf32>
    %cst_63 = arith.constant dense<0.000000e+00> : vector<8xf32>
    %112 = vector.multi_reduction <add>, %111, %cst_63 [1] : vector<8x12xf32> to vector<8xf32>
    %113 = vector.shape_cast %112 : vector<8xf32> to vector<8x1xf32>
    %114 = tpu.reciprocal %113 {approx = true} : vector<8x1xf32> -> vector<8x1xf32>
    %cst_64 = arith.constant dense<0.000000e+00> : vector<8x8xf32>
    %115 = tpu.matmul %111, %104, %cst_64 {dimension_numbers = #tpu.dot_dimension_numbers<[1], [0], [0], [1], [0, 0, 1, 1], [], []>} : vector<8x12xf32>, vector<12x8xf32>, vector<8x8xf32> -> vector<8x8xf32>
    %116 = vector.broadcast %114 : vector<8x1xf32> to vector<8x8xf32>
    %117 = arith.mulf %115, %116 : vector<8x8xf32>
    %118 = vector.extract_strided_slice %62 {offsets = [16, 0], sizes = [8, 32], strides = [1, 1]} : vector<32x32xf32> to vector<8x32xf32>
    %cst_65 = arith.constant dense<0.000000e+00> : vector<8x32xf32>
    %119 = tpu.matmul %117, %118, %cst_65 {dimension_numbers = #tpu.dot_dimension_numbers<[1], [0], [0], [1], [0, 0, 1, 1], [], []>} : vector<8x8xf32>, vector<8x32xf32>, vector<8x32xf32> -> vector<8x32xf32>
    %120 = arith.addf %101, %119 : vector<8x32xf32>
    %121 = vector.extract_strided_slice %34 {offsets = [0, 24], sizes = [8, 8], strides = [1, 1]} : vector<8x32xf32> to vector<8x8xf32>
    %122 = vector.extract_strided_slice %55 {offsets = [0, 24], sizes = [12, 8], strides = [1, 1]} : vector<12x32xf32> to vector<12x8xf32>
    %123 = vector.extract_strided_slice %56 {offsets = [0, 24], sizes = [12, 8], strides = [1, 1]} : vector<12x32xf32> to vector<12x8xf32>
    %cst_66 = arith.constant dense<0.000000e+00> : vector<8x12xf32>
    %124 = tpu.matmul %121, %122, %cst_66 {dimension_numbers = #tpu.dot_dimension_numbers<[1], [1], [0], [0], [0, 0, 1, 0], [], []>} : vector<8x8xf32>, vector<12x8xf32>, vector<8x12xf32> -> vector<8x12xf32>
    %125 = arith.addf %124, %61 : vector<8x12xf32>
    %cst_67 = arith.constant dense<0xFF800000> : vector<8xf32>
    %126 = vector.multi_reduction <maximumf>, %125, %cst_67 [1] : vector<8x12xf32> to vector<8xf32>
    %127 = vector.shape_cast %126 : vector<8xf32> to vector<8x1xf32>
    %128 = vector.broadcast %127 : vector<8x1xf32> to vector<8x12xf32>
    %129 = arith.subf %125, %128 : vector<8x12xf32>
    %130 = math.exp %129 : vector<8x12xf32>
    %cst_68 = arith.constant dense<0.000000e+00> : vector<8xf32>
    %131 = vector.multi_reduction <add>, %130, %cst_68 [1] : vector<8x12xf32> to vector<8xf32>
    %132 = vector.shape_cast %131 : vector<8xf32> to vector<8x1xf32>
    %133 = tpu.reciprocal %132 {approx = true} : vector<8x1xf32> -> vector<8x1xf32>
    %cst_69 = arith.constant dense<0.000000e+00> : vector<8x8xf32>
    %134 = tpu.matmul %130, %123, %cst_69 {dimension_numbers = #tpu.dot_dimension_numbers<[1], [0], [0], [1], [0, 0, 1, 1], [], []>} : vector<8x12xf32>, vector<12x8xf32>, vector<8x8xf32> -> vector<8x8xf32>
    %135 = vector.broadcast %133 : vector<8x1xf32> to vector<8x8xf32>
    %136 = arith.mulf %134, %135 : vector<8x8xf32>
    %137 = vector.extract_strided_slice %62 {offsets = [24, 0], sizes = [8, 32], strides = [1, 1]} : vector<32x32xf32> to vector<8x32xf32>
    %cst_70 = arith.constant dense<0.000000e+00> : vector<8x32xf32>
    %138 = tpu.matmul %136, %137, %cst_70 {dimension_numbers = #tpu.dot_dimension_numbers<[1], [0], [0], [1], [0, 0, 1, 1], [], []>} : vector<8x8xf32>, vector<8x32xf32>, vector<8x32xf32> -> vector<8x32xf32>
    %139 = arith.addf %120, %138 : vector<8x32xf32>
    %140 = arith.addf %1, %139 : vector<8x32xf32>
    %c0_71 = arith.constant 0 : index
    %c0_72 = arith.constant 0 : index
    %141 = vector.load %arg13[%c0_71, %c0_72] : memref<1x32xf32, #tpu.memory_space<vmem>>, vector<1x32xf32>
    %142 = vector.broadcast %141 : vector<1x32xf32> to vector<8x32xf32>
    %143 = arith.addf %140, %142 : vector<8x32xf32>
    %c0_73 = arith.constant 0 : index
    %c0_74 = arith.constant 0 : index
    %144 = vector.load %arg14[%c0_73, %c0_74] : memref<1x32xf32, #tpu.memory_space<vmem>>, vector<1x32xf32>
    %c0_75 = arith.constant 0 : index
    %c0_76 = arith.constant 0 : index
    %145 = vector.load %arg15[%c0_75, %c0_76] : memref<1x32xf32, #tpu.memory_space<vmem>>, vector<1x32xf32>
    %cst_77 = arith.constant dense<0.000000e+00> : vector<8xf32>
    %146 = vector.multi_reduction <add>, %143, %cst_77 [1] : vector<8x32xf32> to vector<8xf32>
    %147 = vector.shape_cast %146 : vector<8xf32> to vector<8x1xf32>
    %cst_78 = arith.constant 3.200000e+01 : f32
    %148 = vector.broadcast %cst_78 : f32 to vector<8x1xf32>
    %149 = arith.divf %147, %148 : vector<8x1xf32>
    %150 = vector.broadcast %149 : vector<8x1xf32> to vector<8x32xf32>
    %151 = arith.subf %143, %150 : vector<8x32xf32>
    %152 = arith.mulf %151, %151 : vector<8x32xf32>
    %cst_79 = arith.constant dense<0.000000e+00> : vector<8xf32>
    %153 = vector.multi_reduction <add>, %152, %cst_79 [1] : vector<8x32xf32> to vector<8xf32>
    %154 = vector.shape_cast %153 : vector<8xf32> to vector<8x1xf32>
    %cst_80 = arith.constant 3.100000e+01 : f32
    %155 = vector.broadcast %cst_80 : f32 to vector<8x1xf32>
    %156 = arith.divf %154, %155 : vector<8x1xf32>
    %157 = vector.broadcast %144 : vector<1x32xf32> to vector<8x32xf32>
    %158 = arith.mulf %157, %151 : vector<8x32xf32>
    %159 = math.sqrt %156 : vector<8x1xf32>
    %cst_81 = arith.constant 9.99999997E-7 : f32
    %160 = vector.broadcast %cst_81 : f32 to vector<8x1xf32>
    %161 = arith.addf %159, %160 : vector<8x1xf32>
    %162 = vector.broadcast %161 : vector<8x1xf32> to vector<8x32xf32>
    %163 = arith.divf %158, %162 : vector<8x32xf32>
    %164 = vector.broadcast %145 : vector<1x32xf32> to vector<8x32xf32>
    %165 = arith.addf %163, %164 : vector<8x32xf32>
    %c0_82 = arith.constant 0 : index
    %c0_83 = arith.constant 0 : index
    %166 = vector.load %arg16[%c0_82, %c0_83] : memref<32x64xf32, #tpu.memory_space<vmem>>, vector<32x64xf32>
    %cst_84 = arith.constant dense<0.000000e+00> : vector<8x64xf32>
    %167 = tpu.matmul %165, %166, %cst_84 {dimension_numbers = #tpu.dot_dimension_numbers<[1], [0], [0], [1], [0, 0, 1, 1], [], []>} : vector<8x32xf32>, vector<32x64xf32>, vector<8x64xf32> -> vector<8x64xf32>
    %c0_85 = arith.constant 0 : index
    %c0_86 = arith.constant 0 : index
    %168 = vector.load %arg17[%c0_85, %c0_86] : memref<1x64xf32, #tpu.memory_space<vmem>>, vector<1x64xf32>
    %169 = vector.broadcast %168 : vector<1x64xf32> to vector<8x64xf32>
    %170 = arith.addf %167, %169 : vector<8x64xf32>
    %cst_87 = arith.constant 0.000000e+00 : f32
    %171 = vector.broadcast %cst_87 : f32 to vector<8x64xf32>
    %172 = arith.maximumf %170, %171 : vector<8x64xf32>
    %c0_88 = arith.constant 0 : index
    %c0_89 = arith.constant 0 : index
    %173 = vector.load %arg18[%c0_88, %c0_89] : memref<64x32xf32, #tpu.memory_space<vmem>>, vector<64x32xf32>
    %cst_90 = arith.constant dense<0.000000e+00> : vector<8x32xf32>
    %174 = tpu.matmul %172, %173, %cst_90 {dimension_numbers = #tpu.dot_dimension_numbers<[1], [0], [0], [1], [0, 0, 1, 1], [], []>} : vector<8x64xf32>, vector<64x32xf32>, vector<8x32xf32> -> vector<8x32xf32>
    %175 = arith.addf %143, %174 : vector<8x32xf32>
    %c0_91 = arith.constant 0 : index
    %c0_92 = arith.constant 0 : index
    %176 = vector.load %arg19[%c0_91, %c0_92] : memref<1x32xf32, #tpu.memory_space<vmem>>, vector<1x32xf32>
    %177 = vector.broadcast %176 : vector<1x32xf32> to vector<8x32xf32>
    %178 = arith.addf %175, %177 : vector<8x32xf32>
    %c0_93 = arith.constant 0 : index
    %c0_94 = arith.constant 0 : index
    %c0_95 = arith.constant 0 : index
    %179 = vector.load %arg20[%c0_93, %c0_94, %c0_95] : memref<1x8x32xf32, #tpu.memory_space<vmem>>, vector<1x8x32xf32>
    %180 = vector.shape_cast %179 : vector<1x8x32xf32> to vector<8x32xf32>
    %181 = vector.shape_cast %178 : vector<8x32xf32> to vector<1x8x32xf32>
    tpu.vector_store %arg20[%c0_93, %c0_94, %c0_95], %181 {strides = array<i32>} : memref<1x8x32xf32, #tpu.memory_space<vmem>>, vector<1x8x32xf32>,
    return
  }
  func.func @transform_0(%arg0: i32) -> (i32, i32, i32) {
    %c0_i32 = arith.constant 0 : i32
    %c0_i32_0 = arith.constant 0 : i32
    %c0_i32_1 = arith.constant 0 : i32
    return %arg0, %c0_i32, %c0_i32_0 : i32, i32, i32
  }
  func.func @transform_1(%arg0: i32) -> (i32, i32, i32) {
    %c0_i32 = arith.constant 0 : i32
    %c0_i32_0 = arith.constant 0 : i32
    %c0_i32_1 = arith.constant 0 : i32
    return %arg0, %c0_i32, %c0_i32_0 : i32, i32, i32
  }
  func.func @transform_2(%arg0: i32) -> (i32, i32, i32) {
    %c0_i32 = arith.constant 0 : i32
    %c0_i32_0 = arith.constant 0 : i32
    %c0_i32_1 = arith.constant 0 : i32
    return %arg0, %c0_i32, %c0_i32_0 : i32, i32, i32
  }
  func.func @transform_3(%arg0: i32) -> (i32, i32) {
    %c0_i32 = arith.constant 0 : i32
    %c0_i32_0 = arith.constant 0 : i32
    %c0_i32_1 = arith.constant 0 : i32
    return %c0_i32, %c0_i32_0 : i32, i32
  }
  func.func @transform_4(%arg0: i32) -> (i32, i32) {
    %c0_i32 = arith.constant 0 : i32
    %c0_i32_0 = arith.constant 0 : i32
    %c0_i32_1 = arith.constant 0 : i32
    return %c0_i32, %c0_i32_0 : i32, i32
  }
  func.func @transform_5(%arg0: i32) -> (i32, i32) {
    %c0_i32 = arith.constant 0 : i32
    %c0_i32_0 = arith.constant 0 : i32
    %c0_i32_1 = arith.constant 0 : i32
    return %c0_i32, %c0_i32_0 : i32, i32
  }
  func.func @transform_6(%arg0: i32) -> (i32, i32) {
    %c0_i32 = arith.constant 0 : i32
    %c0_i32_0 = arith.constant 0 : i32
    %c0_i32_1 = arith.constant 0 : i32
    return %c0_i32, %c0_i32_0 : i32, i32
  }
  func.func @transform_7(%arg0: i32) -> (i32, i32) {
    %c0_i32 = arith.constant 0 : i32
    %c0_i32_0 = arith.constant 0 : i32
    %c0_i32_1 = arith.constant 0 : i32
    return %c0_i32, %c0_i32_0 : i32, i32
  }
  func.func @transform_8(%arg0: i32) -> (i32, i32) {
    %c0_i32 = arith.constant 0 : i32
    %c0_i32_0 = arith.constant 0 : i32
    %c0_i32_1 = arith.constant 0 : i32
    return %c0_i32, %c0_i32_0 : i32, i32
  }
  func.func @transform_9(%arg0: i32) -> (i32, i32) {
    %c0_i32 = arith.constant 0 : i32
    %c0_i32_0 = arith.constant 0 : i32
    %c0_i32_1 = arith.constant 0 : i32
    return %c0_i32, %c0_i32_0 : i32, i32
  }
  func.func @transform_10(%arg0: i32) -> (i32, i32) {
    %c0_i32 = arith.constant 0 : i32
    %c0_i32_0 = arith.constant 0 : i32
    %c0_i32_1 = arith.constant 0 : i32
    return %c0_i32, %c0_i32_0 : i32, i32
  }
  func.func @transform_11(%arg0: i32) -> (i32, i32) {
    %c0_i32 = arith.constant 0 : i32
    %c0_i32_0 = arith.constant 0 : i32
    %c0_i32_1 = arith.constant 0 : i32
    return %c0_i32, %c0_i32_0 : i32, i32
  }
  func.func @transform_12(%arg0: i32) -> (i32, i32) {
    %c0_i32 = arith.constant 0 : i32
    %c0_i32_0 = arith.constant 0 : i32
    %c0_i32_1 = arith.constant 0 : i32
    return %c0_i32, %c0_i32_0 : i32, i32
  }
  func.func @transform_13(%arg0: i32) -> (i32, i32) {
    %c0_i32 = arith.constant 0 : i32
    %c0_i32_0 = arith.constant 0 : i32
    %c0_i32_1 = arith.constant 0 : i32
    return %c0_i32, %c0_i32_0 : i32, i32
  }
  func.func @transform_14(%arg0: i32) -> (i32, i32) {
    %c0_i32 = arith.constant 0 : i32
    %c0_i32_0 = arith.constant 0 : i32
    %c0_i32_1 = arith.constant 0 : i32
    return %c0_i32, %c0_i32_0 : i32, i32
  }
  func.func @transform_15(%arg0: i32) -> (i32, i32) {
    %c0_i32 = arith.constant 0 : i32
    %c0_i32_0 = arith.constant 0 : i32
    %c0_i32_1 = arith.constant 0 : i32
    return %c0_i32, %c0_i32_0 : i32, i32
  }
  func.func @transform_16(%arg0: i32) -> (i32, i32) {
    %c0_i32 = arith.constant 0 : i32
    %c0_i32_0 = arith.constant 0 : i32
    %c0_i32_1 = arith.constant 0 : i32
    return %c0_i32, %c0_i32_0 : i32, i32
  }
  func.func @transform_17(%arg0: i32) -> (i32, i32) {
    %c0_i32 = arith.constant 0 : i32
    %c0_i32_0 = arith.constant 0 : i32
    %c0_i32_1 = arith.constant 0 : i32
    return %c0_i32, %c0_i32_0 : i32, i32
  }
  func.func @transform_18(%arg0: i32) -> (i32, i32) {
    %c0_i32 = arith.constant 0 : i32
    %c0_i32_0 = arith.constant 0 : i32
    %c0_i32_1 = arith.constant 0 : i32
    return %c0_i32, %c0_i32_0 : i32, i32
  }
  func.func @transform_19(%arg0: i32) -> (i32, i32, i32) {
    %c0_i32 = arith.constant 0 : i32
    %c0_i32_0 = arith.constant 0 : i32
    %c0_i32_1 = arith.constant 0 : i32
    return %arg0, %c0_i32, %c0_i32_0 : i32, i32, i32
  }
}

</mosaic_0001>

<llo_original>
// kernel: tpu_custom_call.1
$region0: #{tpu_custom_call.1}
  #allocation0 [shape = 'u32[]', space=smem, size = 0x4, offset = 0x4, fixed_abs, tag = 'smem constant byte address 0x4 - core index']
  #allocation1 [shape = 'u32[72,128]{1,0:T(1,128)}', space=vmem, size = 0x9000, scoped, tag = 'internal scratch']
  #allocation2 [shape = 'f32[12,32]{1,0:T(8,128)}', space=vmem, size = 0x2000, scoped, tag = 'scratch operand']
  #allocation3 [shape = 'f32[12,32]{1,0:T(8,128)}', space=vmem, size = 0x2000, scoped, tag = 'scratch operand']
  %s0 = inlined_call_operand.hbm [shape: f32[2,8,32], index: 0, kind: input, shape index: {}]
  %s1 = inlined_call_operand.hbm [shape: f32[2,4,32], index: 1, kind: input, shape index: {}]
  %s2 = inlined_call_operand.hbm [shape: f32[2,8,12], index: 2, kind: input, shape index: {}]
  %s3 = inlined_call_operand.vmem [shape: f32[1,32], index: 3, kind: input, shape index: {}]
  %s4 = inlined_call_operand.vmem [shape: f32[1,32], index: 4, kind: input, shape index: {}]
  %s5 = inlined_call_operand.vmem [shape: f32[32,32], index: 5, kind: input, shape index: {}]
  %s6 = inlined_call_operand.vmem [shape: f32[1,32], index: 6, kind: input, shape index: {}]
  %s7 = inlined_call_operand.vmem [shape: f32[32,32], index: 7, kind: input, shape index: {}]
  %s8 = inlined_call_operand.vmem [shape: f32[1,32], index: 8, kind: input, shape index: {}]
  %s9 = inlined_call_operand.vmem [shape: f32[32,32], index: 9, kind: input, shape index: {}]
  %s10 = inlined_call_operand.vmem [shape: f32[1,32], index: 10, kind: input, shape index: {}]
  %s11 = inlined_call_operand.hbm [shape: f32[32,32], index: 11, kind: input, shape index: {}]
  %s12 = inlined_call_operand.vmem [shape: f32[1,32], index: 12, kind: input, shape index: {}]
  %s13 = inlined_call_operand.vmem [shape: f32[1,32], index: 13, kind: input, shape index: {}]
  %s14 = inlined_call_operand.vmem [shape: f32[1,32], index: 14, kind: input, shape index: {}]
  %s15 = inlined_call_operand.hbm [shape: f32[32,64], index: 15, kind: input, shape index: {}]
  %s16 = inlined_call_operand.vmem [shape: f32[1,64], index: 16, kind: input, shape index: {}]
  %s17 = inlined_call_operand.vmem [shape: f32[64,32], index: 17, kind: input, shape index: {}]
  %s18 = inlined_call_operand.vmem [shape: f32[1,32], index: 18, kind: input, shape index: {}]
  %s19 = inlined_call_operand.hbm [shape: f32[2,8,32], index: 19, kind: output, shape index: {}]
  %s20 = sld [smem:[#allocation0]]
  $region129: #{tpu_custom_call.1} parent=0
    _
  %s22 = ssub.s32 1, %s20
  %s23 = scalar_select 0, %s22, %s20
  $region1: #{tpu_custom_call.1} parent=0
    #allocation4 [shape = 'u8[8192]{0}', space=vmem, size = 0x2000, scoped, tag = 'input window, operand 0']
    #allocation5 [shape = 's32[2]{0}', space=sflag, size = 0x8, scoped, tag = 'scoped memory for tpu_custom_call.1']
    #allocation6 [shape = 's32[2]{0}', space=sflag, size = 0x8, scoped, tag = 'scoped memory for tpu_custom_call.1']
    #allocation7 [shape = 'u8[4096]{0}', space=vmem, size = 0x1000, scoped, tag = 'input window, operand 1']
    #allocation8 [shape = 's32[2]{0}', space=sflag, size = 0x8, scoped, tag = 'scoped memory for tpu_custom_call.1']
    #allocation9 [shape = 'u8[8192]{0}', space=vmem, size = 0x2000, scoped, tag = 'input window, operand 2']
    #allocation10 [shape = 'u8[16384]{0}', space=vmem, size = 0x4000, scoped, tag = 'input window, operand 11, single buffered']
    #allocation11 [shape = 's32[1]{0}', space=sflag, size = 0x4, scoped, tag = 'scoped memory for tpu_custom_call.1']
    #allocation12 [shape = 'u8[16384]{0}', space=vmem, size = 0x4000, scoped, tag = 'input window, operand 15, single buffered']
    #allocation13 [shape = 'u8[8192]{0}', space=vmem, size = 0x2000, scoped, tag = 'output window, operand 0']
    %24 = vsyncpa [#allocation5], 0
    %s25 = scalar_lea.sflag [#allocation5], 1
    %26 = vsyncpa %s25, 0
    %27 = vsyncpa [#allocation8], 0
    %s28 = scalar_lea.sflag [#allocation8], 1
    %29 = vsyncpa %s28, 0
    %30 = vsyncpa [#allocation11], 0
    %31 = vsyncpa [#allocation6], 0
    %s32 = scalar_lea.sflag [#allocation6], 1
    %33 = vsyncpa %s32, 0
    loop: start=0, step=1, limit=4
    $region2: #{tpu_custom_call.1} parent=1 // loop_pre_header
      _
    $region3: #{tpu_custom_call.1} parent=1 // loop_header
      %s35 = sphi 0, %s39
      %p36 = scmp.ge.s32.totalorder %s35, 4
      %s45 = sphi 0, %s47
      %s48 = sphi 0, %s45
      %s49 = sphi 0, %s48
      %s65 = sphi 0, %s49
      %s71 = sphi 0, %s73
      %s74 = sphi 0, %s71
      %s75 = sphi 0, %s74
      %s91 = sphi 0, %s75
      %s97 = sphi 0, %s99
      %s100 = sphi 0, %s97
      %s101 = sphi 0, %s100
      %s117 = sphi 0, %s101
      %s121 = sphi 0, %s121
      %s123 = sphi 0, %s121
      %s124 = sphi 0, %s123
      %s138 = sphi 0, %s124
      %s142 = sphi 0, %s142
      %s144 = sphi 0, %s142
      %s145 = sphi 0, %s144
      %s159 = sphi 0, %s145
      %s163 = sphi 0, %s163
      %s165 = sphi 0, %s163
      %s166 = sphi 0, %s165
      %s180 = sphi 0, %s166
      %s184 = sphi 0, %s184
      %s186 = sphi 0, %s184
      %s187 = sphi 0, %s186
      %s201 = sphi 0, %s187
      %s205 = sphi 0, %s205
      %s207 = sphi 0, %s205
      %s208 = sphi 0, %s207
      %s222 = sphi 0, %s208
      %s226 = sphi 0, %s226
      %s228 = sphi 0, %s226
      %s229 = sphi 0, %s228
      %s243 = sphi 0, %s229
      %s247 = sphi 0, %s247
      %s249 = sphi 0, %s247
      %s250 = sphi 0, %s249
      %s264 = sphi 0, %s250
      %s268 = sphi 0, %s268
      %s270 = sphi 0, %s268
      %s271 = sphi 0, %s270
      %s285 = sphi 0, %s271
      %s289 = sphi 0, %s289
      %s291 = sphi 0, %s289
      %s292 = sphi 0, %s291
      %s306 = sphi 0, %s292
      %s310 = sphi 0, %s310
      %s312 = sphi 0, %s310
      %s313 = sphi 0, %s312
      %s327 = sphi 0, %s313
      %s331 = sphi 0, %s331
      %s333 = sphi 0, %s331
      %s334 = sphi 0, %s333
      %s348 = sphi 0, %s334
      %s352 = sphi 0, %s352
      %s354 = sphi 0, %s352
      %s355 = sphi 0, %s354
      %s369 = sphi 0, %s355
      %s373 = sphi 0, %s373
      %s375 = sphi 0, %s373
      %s376 = sphi 0, %s375
      %s390 = sphi 0, %s376
      %s394 = sphi 0, %s394
      %s396 = sphi 0, %s394
      %s397 = sphi 0, %s396
      %s411 = sphi 0, %s397
      %s415 = sphi 0, %s415
      %s417 = sphi 0, %s415
      %s418 = sphi 0, %s417
      %s432 = sphi 0, %s418
      %s436 = sphi 0, %s436
      %s438 = sphi 0, %s436
      %s439 = sphi 0, %s438
      %s453 = sphi 0, %s439
      %s459 = sphi 0, %s461
      %s462 = sphi 0, %s459
      %s463 = sphi 0, %s462
      %s479 = sphi 0, %s463
    $region4: #{tpu_custom_call.1} parent=1 // loop_header_branch
      %38 = sbr.rel (%p36) target = $region8
    $region5: #{tpu_custom_call.1} parent=1 // loop_body
      %s40 = ssub.s32 %s35, 1
      %s41 = ssub.s32 %s35, 2
      %s42 = sadd.s32 %s35, 1
      %s43 = ssub.s32 %s35, %s42
      %p44 = scmp.eq.s32.totalorder %s43, 0
      %s46 = sadd.s32 %s45, 1
      %s47 = scalar_select %p44, %s45, %s46
      %p50 = pneg %p44
      %p51 = scmp.eq.s32.totalorder %s35, 1
      %p52 = por %p50, %p51
      %p53 = scmp.ne.s32.totalorder %s45, %s48
      %p54 = scmp.eq.s32.totalorder %s35, 0
      %p55 = por %p53, %p54
      %p56 = scmp.ne.s32.totalorder %s45, %s48
      %p57 = scmp.eq.s32.totalorder %s40, 1
      %p58 = por %p56, %p57
      %p59 = scmp.ne.s32.totalorder %s48, %s49
      %p60 = scmp.eq.s32.totalorder %s40, 0
      %p61 = por %p59, %p60
      %p62 = scmp.ne.s32.totalorder %s48, %s49
      %p63 = scmp.eq.s32.totalorder %s41, 1
      %p64 = por %p62, %p63
      %p66 = scmp.ne.s32.totalorder %s49, %s65
      %p67 = scmp.eq.s32.totalorder %s41, 0
      %p68 = por %p66, %p67
      %s69 = ssub.s32 %s35, %s42
      %p70 = scmp.eq.s32.totalorder %s69, 0
      %s72 = sadd.s32 %s71, 1
      %s73 = scalar_select %p70, %s71, %s72
      %p76 = pneg %p70
      %p77 = scmp.eq.s32.totalorder %s35, 1
      %p78 = por %p76, %p77
      %p79 = scmp.ne.s32.totalorder %s71, %s74
      %p80 = scmp.eq.s32.totalorder %s35, 0
      %p81 = por %p79, %p80
      %p82 = scmp.ne.s32.totalorder %s71, %s74
      %p83 = scmp.eq.s32.totalorder %s40, 1
      %p84 = por %p82, %p83
      %p85 = scmp.ne.s32.totalorder %s74, %s75
      %p86 = scmp.eq.s32.totalorder %s40, 0
      %p87 = por %p85, %p86
      %p88 = scmp.ne.s32.totalorder %s74, %s75
      %p89 = scmp.eq.s32.totalorder %s41, 1
      %p90 = por %p88, %p89
      %p92 = scmp.ne.s32.totalorder %s75, %s91
      %p93 = scmp.eq.s32.totalorder %s41, 0
      %p94 = por %p92, %p93
      %s95 = ssub.s32 %s35, %s42
      %p96 = scmp.eq.s32.totalorder %s95, 0
      %s98 = sadd.s32 %s97, 1
      %s99 = scalar_select %p96, %s97, %s98
      %p102 = pneg %p96
      %p103 = scmp.eq.s32.totalorder %s35, 1
      %p104 = por %p102, %p103
      %p105 = scmp.ne.s32.totalorder %s97, %s100
      %p106 = scmp.eq.s32.totalorder %s35, 0
      %p107 = por %p105, %p106
      %p108 = scmp.ne.s32.totalorder %s97, %s100
      %p109 = scmp.eq.s32.totalorder %s40, 1
      %p110 = por %p108, %p109
      %p111 = scmp.ne.s32.totalorder %s100, %s101
      %p112 = scmp.eq.s32.totalorder %s40, 0
      %p113 = por %p111, %p112
      %p114 = scmp.ne.s32.totalorder %s100, %s101
      %p115 = scmp.eq.s32.totalorder %s41, 1
      %p116 = por %p114, %p115
      %p118 = scmp.ne.s32.totalorder %s101, %s117
      %p119 = scmp.eq.s32.totalorder %s41, 0
      %p120 = por %p118, %p119
      %s122 = sadd.s32 %s121, 1
      %p125 = scmp.eq.s32.totalorder %s35, 1
      %p126 = scmp.ne.s32.totalorder %s121, %s123
      %p127 = scmp.eq.s32.totalorder %s35, 0
      %p128 = por %p126, %p127
      %p129 = scmp.ne.s32.totalorder %s121, %s123
      %p130 = scmp.eq.s32.totalorder %s40, 1
      %p131 = por %p129, %p130
      %p132 = scmp.ne.s32.totalorder %s123, %s124
      %p133 = scmp.eq.s32.totalorder %s40, 0
      %p134 = por %p132, %p133
      %p135 = scmp.ne.s32.totalorder %s123, %s124
      %p136 = scmp.eq.s32.totalorder %s41, 1
      %p137 = por %p135, %p136
      %p139 = scmp.ne.s32.totalorder %s124, %s138
      %p140 = scmp.eq.s32.totalorder %s41, 0
      %p141 = por %p139, %p140
      %s143 = sadd.s32 %s142, 1
      %p146 = scmp.eq.s32.totalorder %s35, 1
      %p147 = scmp.ne.s32.totalorder %s142, %s144
      %p148 = scmp.eq.s32.totalorder %s35, 0
      %p149 = por %p147, %p148
      %p150 = scmp.ne.s32.totalorder %s142, %s144
      %p151 = scmp.eq.s32.totalorder %s40, 1
      %p152 = por %p150, %p151
      %p153 = scmp.ne.s32.totalorder %s144, %s145
      %p154 = scmp.eq.s32.totalorder %s40, 0
      %p155 = por %p153, %p154
      %p156 = scmp.ne.s32.totalorder %s144, %s145
      %p157 = scmp.eq.s32.totalorder %s41, 1
      %p158 = por %p156, %p157
      %p160 = scmp.ne.s32.totalorder %s145, %s159
      %p161 = scmp.eq.s32.totalorder %s41, 0
      %p162 = por %p160, %p161
      %s164 = sadd.s32 %s163, 1
      %p167 = scmp.eq.s32.totalorder %s35, 1
      %p168 = scmp.ne.s32.totalorder %s163, %s165
      %p169 = scmp.eq.s32.totalorder %s35, 0
      %p170 = por %p168, %p169
      %p171 = scmp.ne.s32.totalorder %s163, %s165
      %p172 = scmp.eq.s32.totalorder %s40, 1
      %p173 = por %p171, %p172
      %p174 = scmp.ne.s32.totalorder %s165, %s166
      %p175 = scmp.eq.s32.totalorder %s40, 0
      %p176 = por %p174, %p175
      %p177 = scmp.ne.s32.totalorder %s165, %s166
      %p178 = scmp.eq.s32.totalorder %s41, 1
      %p179 = por %p177, %p178
      %p181 = scmp.ne.s32.totalorder %s166, %s180
      %p182 = scmp.eq.s32.totalorder %s41, 0
      %p183 = por %p181, %p182
      %s185 = sadd.s32 %s184, 1
      %p188 = scmp.eq.s32.totalorder %s35, 1
      %p189 = scmp.ne.s32.totalorder %s184, %s186
      %p190 = scmp.eq.s32.totalorder %s35, 0
      %p191 = por %p189, %p190
      %p192 = scmp.ne.s32.totalorder %s184, %s186
      %p193 = scmp.eq.s32.totalorder %s40, 1
      %p194 = por %p192, %p193
      %p195 = scmp.ne.s32.totalorder %s186, %s187
      %p196 = scmp.eq.s32.totalorder %s40, 0
      %p197 = por %p195, %p196
      %p198 = scmp.ne.s32.totalorder %s186, %s187
      %p199 = scmp.eq.s32.totalorder %s41, 1
      %p200 = por %p198, %p199
      %p202 = scmp.ne.s32.totalorder %s187, %s201
      %p203 = scmp.eq.s32.totalorder %s41, 0
      %p204 = por %p202, %p203
      %s206 = sadd.s32 %s205, 1
      %p209 = scmp.eq.s32.totalorder %s35, 1
      %p210 = scmp.ne.s32.totalorder %s205, %s207
      %p211 = scmp.eq.s32.totalorder %s35, 0
      %p212 = por %p210, %p211
      %p213 = scmp.ne.s32.totalorder %s205, %s207
      %p214 = scmp.eq.s32.totalorder %s40, 1
      %p215 = por %p213, %p214
      %p216 = scmp.ne.s32.totalorder %s207, %s208
      %p217 = scmp.eq.s32.totalorder %s40, 0
      %p218 = por %p216, %p217
      %p219 = scmp.ne.s32.totalorder %s207, %s208
      %p220 = scmp.eq.s32.totalorder %s41, 1
      %p221 = por %p219, %p220
      %p223 = scmp.ne.s32.totalorder %s208, %s222
      %p224 = scmp.eq.s32.totalorder %s41, 0
      %p225 = por %p223, %p224
      %s227 = sadd.s32 %s226, 1
      %p230 = scmp.eq.s32.totalorder %s35, 1
      %p231 = scmp.ne.s32.totalorder %s226, %s228
      %p232 = scmp.eq.s32.totalorder %s35, 0
      %p233 = por %p231, %p232
      %p234 = scmp.ne.s32.totalorder %s226, %s228
      %p235 = scmp.eq.s32.totalorder %s40, 1
      %p236 = por %p234, %p235
      %p237 = scmp.ne.s32.totalorder %s228, %s229
      %p238 = scmp.eq.s32.totalorder %s40, 0
      %p239 = por %p237, %p238
      %p240 = scmp.ne.s32.totalorder %s228, %s229
      %p241 = scmp.eq.s32.totalorder %s41, 1
      %p242 = por %p240, %p241
      %p244 = scmp.ne.s32.totalorder %s229, %s243
      %p245 = scmp.eq.s32.totalorder %s41, 0
      %p246 = por %p244, %p245
      %s248 = sadd.s32 %s247, 1
      %p251 = scmp.eq.s32.totalorder %s35, 1
      %p252 = scmp.ne.s32.totalorder %s247, %s249
      %p253 = scmp.eq.s32.totalorder %s35, 0
      %p254 = por %p252, %p253
      %p255 = scmp.ne.s32.totalorder %s247, %s249
      %p256 = scmp.eq.s32.totalorder %s40, 1
      %p257 = por %p255, %p256
      %p258 = scmp.ne.s32.totalorder %s249, %s250
      %p259 = scmp.eq.s32.totalorder %s40, 0
      %p260 = por %p258, %p259
      %p261 = scmp.ne.s32.totalorder %s249, %s250
      %p262 = scmp.eq.s32.totalorder %s41, 1
      %p263 = por %p261, %p262
      %p265 = scmp.ne.s32.totalorder %s250, %s264
      %p266 = scmp.eq.s32.totalorder %s41, 0
      %p267 = por %p265, %p266
      %s269 = sadd.s32 %s268, 1
      %p272 = scmp.eq.s32.totalorder %s35, 1
      %p273 = scmp.ne.s32.totalorder %s268, %s270
      %p274 = scmp.eq.s32.totalorder %s35, 0
      %p275 = por %p273, %p274
      %p276 = scmp.ne.s32.totalorder %s268, %s270
      %p277 = scmp.eq.s32.totalorder %s40, 1
      %p278 = por %p276, %p277
      %p279 = scmp.ne.s32.totalorder %s270, %s271
      %p280 = scmp.eq.s32.totalorder %s40, 0
      %p281 = por %p279, %p280
      %p282 = scmp.ne.s32.totalorder %s270, %s271
      %p283 = scmp.eq.s32.totalorder %s41, 1
      %p284 = por %p282, %p283
      %p286 = scmp.ne.s32.totalorder %s271, %s285
      %p287 = scmp.eq.s32.totalorder %s41, 0
      %p288 = por %p286, %p287
      %s290 = sadd.s32 %s289, 1
      %p293 = scmp.eq.s32.totalorder %s35, 1
      %p294 = scmp.ne.s32.totalorder %s289, %s291
      %p295 = scmp.eq.s32.totalorder %s35, 0
      %p296 = por %p294, %p295
      %p297 = scmp.ne.s32.totalorder %s289, %s291
      %p298 = scmp.eq.s32.totalorder %s40, 1
      %p299 = por %p297, %p298
      %p300 = scmp.ne.s32.totalorder %s291, %s292
      %p301 = scmp.eq.s32.totalorder %s40, 0
      %p302 = por %p300, %p301
      %p303 = scmp.ne.s32.totalorder %s291, %s292
      %p304 = scmp.eq.s32.totalorder %s41, 1
      %p305 = por %p303, %p304
      %p307 = scmp.ne.s32.totalorder %s292, %s306
      %p308 = scmp.eq.s32.totalorder %s41, 0
      %p309 = por %p307, %p308
      %s311 = sadd.s32 %s310, 1
      %p314 = scmp.eq.s32.totalorder %s35, 1
      %p315 = scmp.ne.s32.totalorder %s310, %s312
      %p316 = scmp.eq.s32.totalorder %s35, 0
      %p317 = por %p315, %p316
      %p318 = scmp.ne.s32.totalorder %s310, %s312
      %p319 = scmp.eq.s32.totalorder %s40, 1
      %p320 = por %p318, %p319
      %p321 = scmp.ne.s32.totalorder %s312, %s313
      %p322 = scmp.eq.s32.totalorder %s40, 0
      %p323 = por %p321, %p322
      %p324 = scmp.ne.s32.totalorder %s312, %s313
      %p325 = scmp.eq.s32.totalorder %s41, 1
      %p326 = por %p324, %p325
      %p328 = scmp.ne.s32.totalorder %s313, %s327
      %p329 = scmp.eq.s32.totalorder %s41, 0
      %p330 = por %p328, %p329
      %s332 = sadd.s32 %s331, 1
      %p335 = scmp.eq.s32.totalorder %s35, 1
      %p336 = scmp.ne.s32.totalorder %s331, %s333
      %p337 = scmp.eq.s32.totalorder %s35, 0
      %p338 = por %p336, %p337
      %p339 = scmp.ne.s32.totalorder %s331, %s333
      %p340 = scmp.eq.s32.totalorder %s40, 1
      %p341 = por %p339, %p340
      %p342 = scmp.ne.s32.totalorder %s333, %s334
      %p343 = scmp.eq.s32.totalorder %s40, 0
      %p344 = por %p342, %p343
      %p345 = scmp.ne.s32.totalorder %s333, %s334
      %p346 = scmp.eq.s32.totalorder %s41, 1
      %p347 = por %p345, %p346
      %p349 = scmp.ne.s32.totalorder %s334, %s348
      %p350 = scmp.eq.s32.totalorder %s41, 0
      %p351 = por %p349, %p350
      %s353 = sadd.s32 %s352, 1
      %p356 = scmp.eq.s32.totalorder %s35, 1
      %p357 = scmp.ne.s32.totalorder %s352, %s354
      %p358 = scmp.eq.s32.totalorder %s35, 0
      %p359 = por %p357, %p358
      %p360 = scmp.ne.s32.totalorder %s352, %s354
      %p361 = scmp.eq.s32.totalorder %s40, 1
      %p362 = por %p360, %p361
      %p363 = scmp.ne.s32.totalorder %s354, %s355
      %p364 = scmp.eq.s32.totalorder %s40, 0
      %p365 = por %p363, %p364
      %p366 = scmp.ne.s32.totalorder %s354, %s355
      %p367 = scmp.eq.s32.totalorder %s41, 1
      %p368 = por %p366, %p367
      %p370 = scmp.ne.s32.totalorder %s355, %s369
      %p371 = scmp.eq.s32.totalorder %s41, 0
      %p372 = por %p370, %p371
      %s374 = sadd.s32 %s373, 1
      %p377 = scmp.eq.s32.totalorder %s35, 1
      %p378 = scmp.ne.s32.totalorder %s373, %s375
      %p379 = scmp.eq.s32.totalorder %s35, 0
      %p380 = por %p378, %p379
      %p381 = scmp.ne.s32.totalorder %s373, %s375
      %p382 = scmp.eq.s32.totalorder %s40, 1
      %p383 = por %p381, %p382
      %p384 = scmp.ne.s32.totalorder %s375, %s376
      %p385 = scmp.eq.s32.totalorder %s40, 0
      %p386 = por %p384, %p385
      %p387 = scmp.ne.s32.totalorder %s375, %s376
      %p388 = scmp.eq.s32.totalorder %s41, 1
      %p389 = por %p387, %p388
      %p391 = scmp.ne.s32.totalorder %s376, %s390
      %p392 = scmp.eq.s32.totalorder %s41, 0
      %p393 = por %p391, %p392
      %s395 = sadd.s32 %s394, 1
      %p398 = scmp.eq.s32.totalorder %s35, 1
      %p399 = scmp.ne.s32.totalorder %s394, %s396
      %p400 = scmp.eq.s32.totalorder %s35, 0
      %p401 = por %p399, %p400
      %p402 = scmp.ne.s32.totalorder %s394, %s396
      %p403 = scmp.eq.s32.totalorder %s40, 1
      %p404 = por %p402, %p403
      %p405 = scmp.ne.s32.totalorder %s396, %s397
      %p406 = scmp.eq.s32.totalorder %s40, 0
      %p407 = por %p405, %p406
      %p408 = scmp.ne.s32.totalorder %s396, %s397
      %p409 = scmp.eq.s32.totalorder %s41, 1
      %p410 = por %p408, %p409
      %p412 = scmp.ne.s32.totalorder %s397, %s411
      %p413 = scmp.eq.s32.totalorder %s41, 0
      %p414 = por %p412, %p413
      %s416 = sadd.s32 %s415, 1
      %p419 = scmp.eq.s32.totalorder %s35, 1
      %p420 = scmp.ne.s32.totalorder %s415, %s417
      %p421 = scmp.eq.s32.totalorder %s35, 0
      %p422 = por %p420, %p421
      %p423 = scmp.ne.s32.totalorder %s415, %s417
      %p424 = scmp.eq.s32.totalorder %s40, 1
      %p425 = por %p423, %p424
      %p426 = scmp.ne.s32.totalorder %s417, %s418
      %p427 = scmp.eq.s32.totalorder %s40, 0
      %p428 = por %p426, %p427
      %p429 = scmp.ne.s32.totalorder %s417, %s418
      %p430 = scmp.eq.s32.totalorder %s41, 1
      %p431 = por %p429, %p430
      %p433 = scmp.ne.s32.totalorder %s418, %s432
      %p434 = scmp.eq.s32.totalorder %s41, 0
      %p435 = por %p433, %p434
      %s437 = sadd.s32 %s436, 1
      %p440 = scmp.eq.s32.totalorder %s35, 1
      %p441 = scmp.ne.s32.totalorder %s436, %s438
      %p442 = scmp.eq.s32.totalorder %s35, 0
      %p443 = por %p441, %p442
      %p444 = scmp.ne.s32.totalorder %s436, %s438
      %p445 = scmp.eq.s32.totalorder %s40, 1
      %p446 = por %p444, %p445
      %p447 = scmp.ne.s32.totalorder %s438, %s439
      %p448 = scmp.eq.s32.totalorder %s40, 0
      %p449 = por %p447, %p448
      %p450 = scmp.ne.s32.totalorder %s438, %s439
      %p451 = scmp.eq.s32.totalorder %s41, 1
      %p452 = por %p450, %p451
      %p454 = scmp.ne.s32.totalorder %s439, %s453
      %p455 = scmp.eq.s32.totalorder %s41, 0
      %p456 = por %p454, %p455
      %s457 = ssub.s32 %s35, %s42
      %p458 = scmp.eq.s32.totalorder %s457, 0
      %s460 = sadd.s32 %s459, 1
      %s461 = scalar_select %p458, %s459, %s460
      %p464 = pneg %p458
      %p465 = scmp.eq.s32.totalorder %s35, 1
      %p466 = por %p464, %p465
      %p467 = scmp.ne.s32.totalorder %s459, %s462
      %p468 = scmp.eq.s32.totalorder %s35, 0
      %p469 = por %p467, %p468
      %p470 = scmp.ne.s32.totalorder %s459, %s462
      %p471 = scmp.eq.s32.totalorder %s40, 1
      %p472 = por %p470, %p471
      %p473 = scmp.ne.s32.totalorder %s462, %s463
      %p474 = scmp.eq.s32.totalorder %s40, 0
      %p475 = por %p473, %p474
      %p476 = scmp.ne.s32.totalorder %s462, %s463
      %p477 = scmp.eq.s32.totalorder %s41, 1
      %p478 = por %p476, %p477
      %p480 = scmp.ne.s32.totalorder %s463, %s479
      %p481 = scmp.eq.s32.totalorder %s41, 0
      %p482 = por %p480, %p481
      %p483 = scmp.le.s32.totalorder 1, %s35
      %p484 = scmp.lt.s32.totalorder %s35, 3
      %p485 = pnand %p483, %p484
      %p486 = pneg %p485
      // Predicated region
      $region9: #{tpu_custom_call.1} parent=5 // pred_check
        _
      $region10: #{tpu_custom_call.1} parent=5 // pred_check_branch
        %488 = sbr.rel (%p485) target = $region12
      $region11: #{tpu_custom_call.1} parent=5 // pred_region
        %s489 = ssub.s32 %s35, 1
        // Predicated region
        $region13: #{tpu_custom_call.1} parent=11 // pred_check
          %p490 = pneg %p134
        $region14: #{tpu_custom_call.1} parent=11 // pred_check_branch
          %492 = sbr.rel (%p490) target = $region16
        $region15: #{tpu_custom_call.1} parent=11 // pred_region
          _
        $region16: #{tpu_custom_call.1} parent=11 // pred_fallthru
          _
        // Predicated region
        $region17: #{tpu_custom_call.1} parent=11 // pred_check
          %p493 = pneg %p155
        $region18: #{tpu_custom_call.1} parent=11 // pred_check_branch
          %495 = sbr.rel (%p493) target = $region20
        $region19: #{tpu_custom_call.1} parent=11 // pred_region
          _
        $region20: #{tpu_custom_call.1} parent=11 // pred_fallthru
          _
        // Predicated region
        $region21: #{tpu_custom_call.1} parent=11 // pred_check
          %p496 = pneg %p176
        $region22: #{tpu_custom_call.1} parent=11 // pred_check_branch
          %498 = sbr.rel (%p496) target = $region24
        $region23: #{tpu_custom_call.1} parent=11 // pred_region
          _
        $region24: #{tpu_custom_call.1} parent=11 // pred_fallthru
          _
        // Predicated region
        $region25: #{tpu_custom_call.1} parent=11 // pred_check
          %p499 = pneg %p197
        $region26: #{tpu_custom_call.1} parent=11 // pred_check_branch
          %501 = sbr.rel (%p499) target = $region28
        $region27: #{tpu_custom_call.1} parent=11 // pred_region
          _
        $region28: #{tpu_custom_call.1} parent=11 // pred_fallthru
          _
        // Predicated region
        $region29: #{tpu_custom_call.1} parent=11 // pred_check
          %p502 = pneg %p218
        $region30: #{tpu_custom_call.1} parent=11 // pred_check_branch
          %504 = sbr.rel (%p502) target = $region32
        $region31: #{tpu_custom_call.1} parent=11 // pred_region
          _
        $region32: #{tpu_custom_call.1} parent=11 // pred_fallthru
          _
        // Predicated region
        $region33: #{tpu_custom_call.1} parent=11 // pred_check
          %p505 = pneg %p239
        $region34: #{tpu_custom_call.1} parent=11 // pred_check_branch
          %507 = sbr.rel (%p505) target = $region36
        $region35: #{tpu_custom_call.1} parent=11 // pred_region
          _
        $region36: #{tpu_custom_call.1} parent=11 // pred_fallthru
          _
        // Predicated region
        $region37: #{tpu_custom_call.1} parent=11 // pred_check
          %p508 = pneg %p260
        $region38: #{tpu_custom_call.1} parent=11 // pred_check_branch
          %510 = sbr.rel (%p508) target = $region40
        $region39: #{tpu_custom_call.1} parent=11 // pred_region
          _
        $region40: #{tpu_custom_call.1} parent=11 // pred_fallthru
          _
        // Predicated region
        $region41: #{tpu_custom_call.1} parent=11 // pred_check
          %p511 = pneg %p281
        $region42: #{tpu_custom_call.1} parent=11 // pred_check_branch
          %513 = sbr.rel (%p511) target = $region44
        $region43: #{tpu_custom_call.1} parent=11 // pred_region
          _
        $region44: #{tpu_custom_call.1} parent=11 // pred_fallthru
          _
        // Predicated region
        $region45: #{tpu_custom_call.1} parent=11 // pred_check
          %p514 = pneg %p302
        $region46: #{tpu_custom_call.1} parent=11 // pred_check_branch
          %516 = sbr.rel (%p514) target = $region48
        $region47: #{tpu_custom_call.1} parent=11 // pred_region
          %518 = vsyncadd [#allocation11], 0
          %s519 = sshll.u32 %s11, 4
          %s520 = int_to_ptr.hbm [resolvable:$true] %s519
          %s521 = sshll.u32 [#allocation10], 4
          %s522 = int_to_ptr.vmem [resolvable:$true] %s521
          %527 = dma.hbm_to_vmem [thread:$0]  %s520, 512, %s522, [#allocation11], 128, 128, 8
        $region48: #{tpu_custom_call.1} parent=11 // pred_fallthru
          _
        // Predicated region
        $region49: #{tpu_custom_call.1} parent=11 // pred_check
          %p528 = pneg %p323
        $region50: #{tpu_custom_call.1} parent=11 // pred_check_branch
          %530 = sbr.rel (%p528) target = $region52
        $region51: #{tpu_custom_call.1} parent=11 // pred_region
          _
        $region52: #{tpu_custom_call.1} parent=11 // pred_fallthru
          _
        // Predicated region
        $region53: #{tpu_custom_call.1} parent=11 // pred_check
          %p531 = pneg %p344
        $region54: #{tpu_custom_call.1} parent=11 // pred_check_branch
          %533 = sbr.rel (%p531) target = $region56
        $region55: #{tpu_custom_call.1} parent=11 // pred_region
          _
        $region56: #{tpu_custom_call.1} parent=11 // pred_fallthru
          _
        // Predicated region
        $region57: #{tpu_custom_call.1} parent=11 // pred_check
          %p534 = pneg %p365
        $region58: #{tpu_custom_call.1} parent=11 // pred_check_branch
          %536 = sbr.rel (%p534) target = $region60
        $region59: #{tpu_custom_call.1} parent=11 // pred_region
          _
        $region60: #{tpu_custom_call.1} parent=11 // pred_fallthru
          _
        // Predicated region
        $region61: #{tpu_custom_call.1} parent=11 // pred_check
          %p537 = pneg %p386
        $region62: #{tpu_custom_call.1} parent=11 // pred_check_branch
          %539 = sbr.rel (%p537) target = $region64
        $region63: #{tpu_custom_call.1} parent=11 // pred_region
          %541 = vsyncadd [#allocation11], 0
          %s542 = sshll.u32 %s15, 4
          %s543 = int_to_ptr.hbm [resolvable:$true] %s542
          %s544 = sshll.u32 [#allocation12], 4
          %s545 = int_to_ptr.vmem [resolvable:$true] %s544
          %550 = dma.hbm_to_vmem [thread:$0]  %s543, 512, %s545, [#allocation11], 128, 128, 8
        $region64: #{tpu_custom_call.1} parent=11 // pred_fallthru
          _
        // Predicated region
        $region65: #{tpu_custom_call.1} parent=11 // pred_check
          %p551 = pneg %p407
        $region66: #{tpu_custom_call.1} parent=11 // pred_check_branch
          %553 = sbr.rel (%p551) target = $region68
        $region67: #{tpu_custom_call.1} parent=11 // pred_region
          _
        $region68: #{tpu_custom_call.1} parent=11 // pred_fallthru
          _
        // Predicated region
        $region69: #{tpu_custom_call.1} parent=11 // pred_check
          %p554 = pneg %p428
        $region70: #{tpu_custom_call.1} parent=11 // pred_check_branch
          %556 = sbr.rel (%p554) target = $region72
        $region71: #{tpu_custom_call.1} parent=11 // pred_region
          _
        $region72: #{tpu_custom_call.1} parent=11 // pred_fallthru
          _
        // Predicated region
        $region73: #{tpu_custom_call.1} parent=11 // pred_check
          %p557 = pneg %p449
        $region74: #{tpu_custom_call.1} parent=11 // pred_check_branch
          %559 = sbr.rel (%p557) target = $region76
        $region75: #{tpu_custom_call.1} parent=11 // pred_region
          _
        $region76: #{tpu_custom_call.1} parent=11 // pred_fallthru
          _
      $region12: #{tpu_custom_call.1} parent=5 // pred_fallthru
        _
      %p560 = scmp.lt.s32.totalorder %s35, 2
      // Predicated region
      $region77: #{tpu_custom_call.1} parent=5 // pred_check
        %p561 = pneg %p560
      $region78: #{tpu_custom_call.1} parent=5 // pred_check_branch
        %563 = sbr.rel (%p561) target = $region80
      $region79: #{tpu_custom_call.1} parent=5 // pred_region
        // Predicated region
        $region81: #{tpu_custom_call.1} parent=79 // pred_check
          %p564 = pneg %p55
        $region82: #{tpu_custom_call.1} parent=79 // pred_check_branch
          %566 = sbr.rel (%p564) target = $region84
        $region83: #{tpu_custom_call.1} parent=79 // pred_region
          %s567 = sand.u32 %s45, 1
          %s568 = scalar_lea.sflag [#allocation5], %s567
          %s569 = sand.u32 %s45, 1
          %s570 = smul.addr %s569, 8
          %s571 = scalar_lea.vmem [#allocation4], %s570
          %573 = vsyncadd %s568, 0
          %s574 = smul.addr %s35, 8
          %s575 = scalar_lea.hbm %s0, %s574
          %s577 = sshll.u32 %s575, 4
          %s578 = int_to_ptr.hbm [resolvable:$true] %s577
          %s579 = sshll.u32 %s571, 4
          %s580 = int_to_ptr.vmem [resolvable:$true] %s579
          %582 = dma.hbm_to_vmem [thread:$0]  %s578, 128, %s580, %s568
        $region84: #{tpu_custom_call.1} parent=79 // pred_fallthru
          _
        // Predicated region
        $region85: #{tpu_custom_call.1} parent=79 // pred_check
          %p583 = pneg %p81
        $region86: #{tpu_custom_call.1} parent=79 // pred_check_branch
          %585 = sbr.rel (%p583) target = $region88
        $region87: #{tpu_custom_call.1} parent=79 // pred_region
          %s586 = sand.u32 %s35, 1
          %s587 = scalar_lea.sflag [#allocation8], %s586
          %s588 = sand.u32 %s71, 1
          %s589 = smul.addr %s588, 4
          %s590 = scalar_lea.vmem [#allocation7], %s589
          %592 = vsyncadd %s587, 0
          %s593 = smul.addr %s35, 4
          %s594 = scalar_lea.hbm %s1, %s593
          %s596 = sshll.u32 %s594, 4
          %s597 = int_to_ptr.hbm [resolvable:$true] %s596
          %s598 = sshll.u32 %s590, 4
          %s599 = int_to_ptr.vmem [resolvable:$true] %s598
          %601 = dma.hbm_to_vmem [thread:$0]  %s597, 64, %s599, %s587
        $region88: #{tpu_custom_call.1} parent=79 // pred_fallthru
          _
        // Predicated region
        $region89: #{tpu_custom_call.1} parent=79 // pred_check
          %p602 = pneg %p107
        $region90: #{tpu_custom_call.1} parent=79 // pred_check_branch
          %604 = sbr.rel (%p602) target = $region92
        $region91: #{tpu_custom_call.1} parent=79 // pred_region
          %s605 = sand.u32 %s35, 1
          %s606 = scalar_lea.sflag [#allocation8], %s605
          %s607 = sand.u32 %s97, 1
          %s608 = smul.addr %s607, 8
          %s609 = scalar_lea.vmem [#allocation9], %s608
          %611 = vsyncadd %s606, 0
          %s612 = smul.addr %s35, 8
          %s613 = scalar_lea.hbm %s2, %s612
          %s615 = sshll.u32 %s613, 4
          %s616 = int_to_ptr.hbm [resolvable:$true] %s615
          %s617 = sshll.u32 %s609, 4
          %s618 = int_to_ptr.vmem [resolvable:$true] %s617
          %620 = dma.hbm_to_vmem [thread:$0]  %s616, 128, %s618, %s606
        $region92: #{tpu_custom_call.1} parent=79 // pred_fallthru
          _
      $region80: #{tpu_custom_call.1} parent=5 // pred_fallthru
        _
      %p621 = scmp.le.s32.totalorder 1, %s35
      %p622 = scmp.lt.s32.totalorder %s35, 3
      %p623 = pnand %p621, %p622
      %p624 = pneg %p623
      // Predicated region
      $region93: #{tpu_custom_call.1} parent=5 // pred_check
        _
      $region94: #{tpu_custom_call.1} parent=5 // pred_check_branch
        %626 = sbr.rel (%p623) target = $region96
      $region95: #{tpu_custom_call.1} parent=5 // pred_region
        %s627 = ssub.s32 %s35, 1
        %s628 = sand.u32 %s48, 1
        %s629 = scalar_lea.sflag [#allocation5], %s628
        %s630 = sand.u32 %s48, 1
        %s631 = smul.addr %s630, 8
        %s632 = scalar_lea.vmem [#allocation4], %s631
        // Predicated region
        $region97: #{tpu_custom_call.1} parent=95 // pred_check
          %p633 = pneg %p61
        $region98: #{tpu_custom_call.1} parent=95 // pred_check_branch
          %635 = sbr.rel (%p633) target = $region100
        $region99: #{tpu_custom_call.1} parent=95 // pred_region
          %637 = dma.done %s629, 128
        $region100: #{tpu_custom_call.1} parent=95 // pred_fallthru
          _
        %s638 = sand.u32 %s40, 1
        %s639 = scalar_lea.sflag [#allocation8], %s638
        %s640 = sand.u32 %s74, 1
        %s641 = smul.addr %s640, 4
        %s642 = scalar_lea.vmem [#allocation7], %s641
        // Predicated region
        $region101: #{tpu_custom_call.1} parent=95 // pred_check
          %p643 = pneg %p87
        $region102: #{tpu_custom_call.1} parent=95 // pred_check_branch
          %645 = sbr.rel (%p643) target = $region104
        $region103: #{tpu_custom_call.1} parent=95 // pred_region
          %647 = dma.done %s639, 64
        $region104: #{tpu_custom_call.1} parent=95 // pred_fallthru
          _
        %s648 = sand.u32 %s40, 1
        %s649 = scalar_lea.sflag [#allocation8], %s648
        %s650 = sand.u32 %s100, 1
        %s651 = smul.addr %s650, 8
        %s652 = scalar_lea.vmem [#allocation9], %s651
        // Predicated region
        $region105: #{tpu_custom_call.1} parent=95 // pred_check
          %p653 = pneg %p113
        $region106: #{tpu_custom_call.1} parent=95 // pred_check_branch
          %655 = sbr.rel (%p653) target = $region108
        $region107: #{tpu_custom_call.1} parent=95 // pred_region
          %657 = dma.done %s649, 128
        $region108: #{tpu_custom_call.1} parent=95 // pred_fallthru
          _
        // Predicated region
        $region109: #{tpu_custom_call.1} parent=95 // pred_check
          %p658 = pneg %p302
        $region110: #{tpu_custom_call.1} parent=95 // pred_check_branch
          %660 = sbr.rel (%p658) target = $region112
        $region111: #{tpu_custom_call.1} parent=95 // pred_region
          %662 = dma.done [#allocation11], 512
        $region112: #{tpu_custom_call.1} parent=95 // pred_fallthru
          _
        // Predicated region
        $region113: #{tpu_custom_call.1} parent=95 // pred_check
          %p663 = pneg %p386
        $region114: #{tpu_custom_call.1} parent=95 // pred_check_branch
          %665 = sbr.rel (%p663) target = $region116
        $region115: #{tpu_custom_call.1} parent=95 // pred_region
          %667 = dma.done [#allocation11], 512
        $region116: #{tpu_custom_call.1} parent=95 // pred_fallthru
          _
        %s668 = sand.u32 %s48, 1
        %s669 = scalar_lea.sflag [#allocation5], %s668
        %s670 = sand.u32 %s48, 1
        %s671 = smul.addr %s670, 8
        %s672 = scalar_lea.vmem [#allocation4], %s671
        %p673 = pneg %p61
        %p674 = pneg %p58
        %s675 = sand.u32 %s40, 1
        %s676 = scalar_lea.sflag [#allocation8], %s675
        %s677 = sand.u32 %s74, 1
        %s678 = smul.addr %s677, 4
        %s679 = scalar_lea.vmem [#allocation7], %s678
        %p680 = pneg %p87
        %p681 = pneg %p84
        %s682 = sand.u32 %s40, 1
        %s683 = scalar_lea.sflag [#allocation8], %s682
        %s684 = sand.u32 %s100, 1
        %s685 = smul.addr %s684, 8
        %s686 = scalar_lea.vmem [#allocation9], %s685
        %p687 = pneg %p113
        %p688 = pneg %p110
        %p689 = pneg %p134
        %p690 = pneg %p131
        %p691 = pneg %p155
        %p692 = pneg %p152
        %p693 = pneg %p176
        %p694 = pneg %p173
        %p695 = pneg %p197
        %p696 = pneg %p194
        %p697 = pneg %p218
        %p698 = pneg %p215
        %p699 = pneg %p239
        %p700 = pneg %p236
        %p701 = pneg %p260
        %p702 = pneg %p257
        %p703 = pneg %p281
        %p704 = pneg %p278
        %p705 = pneg %p302
        %p706 = pneg %p299
        %p707 = pneg %p323
        %p708 = pneg %p320
        %p709 = pneg %p344
        %p710 = pneg %p341
        %p711 = pneg %p365
        %p712 = pneg %p362
        %p713 = pneg %p386
        %p714 = pneg %p383
        %p715 = pneg %p407
        %p716 = pneg %p404
        %p717 = pneg %p428
        %p718 = pneg %p425
        %p719 = pneg %p449
        %p720 = pneg %p446
        %p721 = pneg %p475
        %p722 = pneg %p472
        %s723 = sand.u32 %s462, 1
        %s724 = scalar_lea.sflag [#allocation6], %s723
        %s725 = sand.u32 %s462, 1
        %s726 = smul.addr %s725, 8
        %s727 = scalar_lea.vmem [#allocation13], %s726
        %v728 = vld [vmem:[%s632] sm:$0xff]
        %v729 = vld [vmem:[%s642] sm:$0xf]
        %v730 = vld [vmem:[%s652] sm:$0xff]
        %v731 = vld [vmem:[%s3] sm:$0x1]
        %v732 = vld [vmem:[%s4] sm:$0x1]
        %vm733 = vcmask 261120
        %v734 = vsel %vm733, %v728, 0.0
        %735 = vadd.xlane.f32.xlu0 %v734
        %v736 = vpop.xlane.xlu0 %735
        %v737 = vrcp.pop 32.0
        %v738 = vmul.f32 32.0, %v737
        %v739 = vsub.f32 1.0, %v738
        %v740 = vmul.f32 %v737, %v739
        %v741 = vadd.f32 %v737, %v740
        %vm742 = vweird.f32 %v737
        %v743 = vsel %vm742, %v737, %v741
        %v744 = vmul.f32 %v736, %v743
        %v745 = vsub.f32 %v728, %v744
        %v746 = vmul.f32 %v745, %v745
        %v747 = vsel %vm733, %v746, 0.0
        %748 = vadd.xlane.f32.xlu0 %v747
        %v749 = vpop.xlane.xlu0 %748
        %v750 = vrcp.pop 31.0
        %v751 = vmul.f32 31.0, %v750
        %v752 = vsub.f32 1.0, %v751
        %v753 = vmul.f32 %v750, %v752
        %v754 = vadd.f32 %v750, %v753
        %vm755 = vweird.f32 %v750
        %v756 = vsel %vm755, %v750, %v754
        %v757 = vmul.f32 %v749, %v756
        %v759 = vperm.slane %v731, 0
        %v761 = vmul.f32 %v759, %v745
        %v762 = vrsqrt.pop %v757
        %v763 = vmul.f32 %v762, %v757
        %v764 = vmul.f32 %v763, %v762
        %v765 = vmul.f32 0.5, %v764
        %v766 = vsub.f32 1.5, %v765
        %v767 = vmul.f32 %v762, %v766
        %v768 = vmul.f32 %v757, %v767
        %vm769 = vcmp.eq.f32.partialorder %v757, inf
        %v770 = vsel %vm769, %v757, %v768
        %vm771 = vcmp.eq.f32.partialorder %v757, 0.0
        %v772 = vand.u32 %v757, 2147483648
        %v773 = vsel %vm771, %v772, %v770
        %v774 = vadd.f32 %v773, 1e-06
        %v775 = vrcp.pop %v774
        %v776 = vmul.f32 %v774, %v775
        %v777 = vsub.f32 1.0, %v776
        %v778 = vmul.f32 %v775, %v777
        %v779 = vadd.f32 %v775, %v778
        %vm780 = vweird.f32 %v774
        %vm781 = vweird.f32 %v775
        %vm782 = vmor %vm780, %vm781
        %v783 = vsel %vm782, %v775, %v779
        %v784 = vand.u32 2147483647, %v774
        %vm785 = vcmp.eq.f32.partialorder %v784, 8.507059e+37
        %v786 = vand.u32 %v774, 2147483648
        %v787 = vor.u32 1.1754944e-38, %v786
        %v788 = vsel %vm785, %v787, %v783
        %v789 = vmul.f32 %v761, %v788
        %v791 = vperm.slane %v732, 0
        %v793 = vadd.f32 %v789, %v791
        %v794 = vld [vmem:[%s5] sm:$0xff]
        %v795 = vld [vmem:[%s5 + $0x8] sm:$0xff]
        %v796 = vld [vmem:[%s5 + $0x10] sm:$0xff]
        %v797 = vld [vmem:[%s5 + $0x18] sm:$0xff]
        %v798 = vld [vmem:[%s6] sm:$0x1]
        %v800 = vperm.slane %v798, 0
        %v803 = vsel %vm733, %v793, 0
        %805 = vmatpush.msra.mxu0 0.0
        %806 = vmatpush.msra.mxu0 0.0
        %807 = vmatpush.msra.mxu0 0.0
        %808 = vmatpush.msra.mxu0 0.0
        %809 = vmatpush.msra.mxu0 0.0
        %810 = vmatpush.msra.mxu0 0.0
        %811 = vmatpush.msra.mxu0 0.0
        %812 = vmatpush.msra.mxu0 0.0
        %813 = vmatpush.msra.mxu0 0.0
        %814 = vmatpush.msra.mxu0 0.0
        %815 = vmatpush.msra.mxu0 0.0
        %816 = vmatpush.msra.mxu0 0.0
        %817 = vmatpush.msra.mxu0 %v797
        %818 = vmatpush.msra.mxu0 %v796
        %819 = vmatpush.msra.mxu0 %v795
        %820 = vmatpush.msra.mxu0 %v794
        %821 = vmatmul.f32.gmra.mxu0 %v803
        %v822 = vpop.f32.mrf.mxu0
        %v823 = vadd.f32 %v800, %v822
        %824 = vdwg.mxu0
        %v825 = vmul.f32 %v823, 0.35355338
        %v826 = vld [vmem:[%s7] sm:$0xff]
        %v827 = vld [vmem:[%s7 + $0x8] sm:$0xff]
        %v828 = vld [vmem:[%s7 + $0x10] sm:$0xff]
        %v829 = vld [vmem:[%s7 + $0x18] sm:$0xff]
        %v830 = vld [vmem:[%s8] sm:$0x1]
        %v831 = vld [vmem:[%s9] sm:$0xff]
        %v832 = vld [vmem:[%s9 + $0x8] sm:$0xff]
        %v833 = vld [vmem:[%s9 + $0x10] sm:$0xff]
        %v834 = vld [vmem:[%s9 + $0x18] sm:$0xff]
        %v835 = vld [vmem:[%s10] sm:$0x1]
        %v837 = vperm.slane %v830, 0
        %839 = vmatpush.msra.mxu0 0.0
        %840 = vmatpush.msra.mxu0 0.0
        %841 = vmatpush.msra.mxu0 0.0
        %842 = vmatpush.msra.mxu0 0.0
        %843 = vmatpush.msra.mxu0 0.0
        %844 = vmatpush.msra.mxu0 0.0
        %845 = vmatpush.msra.mxu0 0.0
        %846 = vmatpush.msra.mxu0 0.0
        %847 = vmatpush.msra.mxu0 0.0
        %848 = vmatpush.msra.mxu0 0.0
        %849 = vmatpush.msra.mxu0 0.0
        %850 = vmatpush.msra.mxu0 0.0
        %851 = vmatpush.msra.mxu0 %v829
        %852 = vmatpush.msra.mxu0 %v828
        %853 = vmatpush.msra.mxu0 %v827
        %854 = vmatpush.msra.mxu0 %v826
        %855 = vmatmul.f32.gmra.mxu0 %v803
        %v856 = vpop.f32.mrf.mxu0
        %v857 = vadd.f32 %v837, %v856
        %858 = vdwg.mxu0
        %859 = vst.msk [vmem:[#allocation2] sm:$0xff] %vm733, %v857
        %v861 = vsel %vm733, %v729, 0
        %863 = vmatpush.msra.mxu0 0.0
        %864 = vmatpush.msra.mxu0 0.0
        %865 = vmatpush.msra.mxu0 0.0
        %866 = vmatpush.msra.mxu0 0.0
        %867 = vmatpush.msra.mxu0 0.0
        %868 = vmatpush.msra.mxu0 0.0
        %869 = vmatpush.msra.mxu0 0.0
        %870 = vmatpush.msra.mxu0 0.0
        %871 = vmatpush.msra.mxu0 0.0
        %872 = vmatpush.msra.mxu0 0.0
        %873 = vmatpush.msra.mxu0 0.0
        %874 = vmatpush.msra.mxu0 0.0
        %875 = vmatpush.msra.mxu0 %v829
        %876 = vmatpush.msra.mxu0 %v828
        %877 = vmatpush.msra.mxu0 %v827
        %878 = vmatpush.msra.mxu0 %v826
        %879 = vmatmul.f32.gmra.mxu0 %v861
        %v880 = vpop.f32.mrf.mxu0
        %v881 = vadd.f32 %v837, %v880
        %882 = vdwg.mxu0
        %vm883 = vcmask 257024
        %884 = vst.msk [vmem:[#allocation2 + $0x8] sm:$0xf] %vm883, %v881
        %v886 = vperm.slane %v835, 0
        %888 = vmatpush.msra.mxu0 0.0
        %889 = vmatpush.msra.mxu0 0.0
        %890 = vmatpush.msra.mxu0 0.0
        %891 = vmatpush.msra.mxu0 0.0
        %892 = vmatpush.msra.mxu0 0.0
        %893 = vmatpush.msra.mxu0 0.0
        %894 = vmatpush.msra.mxu0 0.0
        %895 = vmatpush.msra.mxu0 0.0
        %896 = vmatpush.msra.mxu0 0.0
        %897 = vmatpush.msra.mxu0 0.0
        %898 = vmatpush.msra.mxu0 0.0
        %899 = vmatpush.msra.mxu0 0.0
        %900 = vmatpush.msra.mxu0 %v834
        %901 = vmatpush.msra.mxu0 %v833
        %902 = vmatpush.msra.mxu0 %v832
        %903 = vmatpush.msra.mxu0 %v831
        %904 = vmatmul.f32.gmra.mxu0 %v803
        %v905 = vpop.f32.mrf.mxu0
        %v906 = vadd.f32 %v886, %v905
        %907 = vdwg.mxu0
        %908 = vst.msk [vmem:[#allocation3] sm:$0xff] %vm733, %v906
        %909 = vmatpush.msra.mxu0 0.0
        %910 = vmatpush.msra.mxu0 0.0
        %911 = vmatpush.msra.mxu0 0.0
        %912 = vmatpush.msra.mxu0 0.0
        %913 = vmatpush.msra.mxu0 0.0
        %914 = vmatpush.msra.mxu0 0.0
        %915 = vmatpush.msra.mxu0 0.0
        %916 = vmatpush.msra.mxu0 0.0
        %917 = vmatpush.msra.mxu0 0.0
        %918 = vmatpush.msra.mxu0 0.0
        %919 = vmatpush.msra.mxu0 0.0
        %920 = vmatpush.msra.mxu0 0.0
        %921 = vmatpush.msra.mxu0 %v834
        %922 = vmatpush.msra.mxu0 %v833
        %923 = vmatpush.msra.mxu0 %v832
        %924 = vmatpush.msra.mxu0 %v831
        %925 = vmatmul.f32.gmra.mxu0 %v861
        %v926 = vpop.f32.mrf.mxu0
        %v927 = vadd.f32 %v886, %v926
        %928 = vdwg.mxu0
        %929 = vst.msk [vmem:[#allocation3 + $0x8] sm:$0xf] %vm883, %v927
        %v930 = vld [vmem:[#allocation2] sm:$0xff]
        %v931 = vld [vmem:[#allocation2 + $0x8] sm:$0xf]
        %v932 = vld [vmem:[#allocation3] sm:$0xff]
        %v933 = vld [vmem:[#allocation3 + $0x8] sm:$0xf]
        %vm934 = vcmp.eq.f32.partialorder %v730, 0.0
        %v935 = vsel %vm934, -1e+09, 0.0
        %v936 = vld [vmem:[#allocation10] sm:$0xff]
        %v937 = vld [vmem:[#allocation10 + $0x8] sm:$0xff]
        %v938 = vld [vmem:[#allocation10 + $0x10] sm:$0xff]
        %v939 = vld [vmem:[#allocation10 + $0x18] sm:$0xff]
        %vm940 = vcmask 64512
        %v942 = vsel %vm940, %v825, 0
        %v945 = vsel %vm940, %v930, 0
        %v948 = vsel %vm940, %v931, 0
        %950 = vmatpush.xpose.msra.mxu0 0.0
        %951 = vmatpush.xpose.msra.mxu0 0.0
        %952 = vmatpush.xpose.msra.mxu0 0.0
        %953 = vmatpush.xpose.msra.mxu0 0.0
        %954 = vmatpush.xpose.msra.mxu0 0.0
        %955 = vmatpush.xpose.msra.mxu0 0.0
        %956 = vmatpush.xpose.msra.mxu0 0.0
        %957 = vmatpush.xpose.msra.mxu0 0.0
        %958 = vmatpush.xpose.msra.mxu0 0.0
        %959 = vmatpush.xpose.msra.mxu0 0.0
        %960 = vmatpush.xpose.msra.mxu0 0.0
        %961 = vmatpush.xpose.msra.mxu0 0.0
        %962 = vmatpush.xpose.msra.mxu0 0.0
        %963 = vmatpush.xpose.msra.mxu0 0.0
        %964 = vmatpush.xpose.msra.mxu0 %v948
        %965 = vmatpush.xpose.msra.mxu0 %v945
        %966 = vmatmul.f32.gmra.mxu0 %v942
        %v967 = vpop.f32.mrf.mxu0
        %v968 = vadd.f32 %v935, %v967
        %969 = vdwg.mxu0
        %vm970 = vcmask 97280
        %v971 = vsel %vm970, %v968, -inf
        %972 = vmax.xlane.f32.xlu0 %v971
        %v973 = vpop.xlane.xlu0 %972
        %v974 = vsub.f32 %v968, %v973
        %v975 = vmul.f32 %v974, 1.442695
        %v976 = vpow.pop %v975
        %v977 = vsel %vm970, %v976, 0.0
        %978 = vadd.xlane.f32.xlu0 %v977
        %v979 = vpop.xlane.xlu0 %978
        %v980 = vrcp.pop %v979
        %v982 = vsel %vm970, %v976, 0
        %vm984 = vcmask 1043456
        %v986 = vsel %vm984, %v933, 0
        %988 = vmatpush.msra.mxu0 0.0
        %989 = vmatpush.msra.mxu0 0.0
        %990 = vmatpush.msra.mxu0 0.0
        %991 = vmatpush.msra.mxu0 0.0
        %992 = vmatpush.msra.mxu0 0.0
        %993 = vmatpush.msra.mxu0 0.0
        %994 = vmatpush.msra.mxu0 0.0
        %995 = vmatpush.msra.mxu0 0.0
        %996 = vmatpush.msra.mxu0 0.0
        %997 = vmatpush.msra.mxu0 0.0
        %998 = vmatpush.msra.mxu0 0.0
        %999 = vmatpush.msra.mxu0 0.0
        %1000 = vmatpush.msra.mxu0 0.0
        %1001 = vmatpush.msra.mxu0 0.0
        %1002 = vmatpush.msra.mxu0 %v986
        %1003 = vmatpush.msra.mxu0 %v932
        %1004 = vmatmul.f32.gmra.mxu0 %v982
        %v1005 = vpop.f32.mrf.mxu0
        %v1006 = vadd.f32 0.0, %v1005
        %1007 = vdwg.mxu0
        %v1008 = vmul.f32 %v1006, %v980
        %1009 = vrot.lane.b32.xlu0 %v825, 120
        %v1010 = vpop.permute.xlu0 %1009
        %1011 = vrot.lane.b32.xlu0 %v930, 120
        %v1012 = vpop.permute.xlu0 %1011
        %1013 = vrot.lane.b32.xlu0 %v931, 120
        %v1014 = vpop.permute.xlu0 %1013
        %v1015 = vsel %vm940, %v1010, 0
        %v1017 = vsel %vm940, %v1012, 0
        %v1019 = vsel %vm940, %v1014, 0
        %1021 = vmatpush.xpose.msra.mxu0 0.0
        %1022 = vmatpush.xpose.msra.mxu0 0.0
        %1023 = vmatpush.xpose.msra.mxu0 0.0
        %1024 = vmatpush.xpose.msra.mxu0 0.0
        %1025 = vmatpush.xpose.msra.mxu0 0.0
        %1026 = vmatpush.xpose.msra.mxu0 0.0
        %1027 = vmatpush.xpose.msra.mxu0 0.0
        %1028 = vmatpush.xpose.msra.mxu0 0.0
        %1029 = vmatpush.xpose.msra.mxu0 0.0
        %1030 = vmatpush.xpose.msra.mxu0 0.0
        %1031 = vmatpush.xpose.msra.mxu0 0.0
        %1032 = vmatpush.xpose.msra.mxu0 0.0
        %1033 = vmatpush.xpose.msra.mxu0 0.0
        %1034 = vmatpush.xpose.msra.mxu0 0.0
        %1035 = vmatpush.xpose.msra.mxu0 %v1019
        %1036 = vmatpush.xpose.msra.mxu0 %v1017
        %1037 = vmatmul.f32.gmra.mxu0 %v1015
        %v1038 = vpop.f32.mrf.mxu0
        %v1039 = vadd.f32 %v935, %v1038
        %1040 = vdwg.mxu0
        %v1041 = vsel %vm970, %v1039, -inf
        %1042 = vmax.xlane.f32.xlu0 %v1041
        %v1043 = vpop.xlane.xlu0 %1042
        %v1044 = vsub.f32 %v1039, %v1043
        %v1045 = vmul.f32 %v1044, 1.442695
        %v1046 = vpow.pop %v1045
        %v1047 = vsel %vm970, %v1046, 0.0
        %1048 = vadd.xlane.f32.xlu0 %v1047
        %v1049 = vpop.xlane.xlu0 %1048
        %v1050 = vrcp.pop %v1049
        %1052 = vrot.lane.b32.xlu0 %v932, 120
        %v1053 = vpop.permute.xlu0 %1052
        %1054 = vrot.lane.b32.xlu0 %v933, 120
        %v1055 = vpop.permute.xlu0 %1054
        %v1058 = vsel %vm970, %v1046, 0
        %v1060 = vsel %vm984, %v1055, 0
        %1062 = vmatpush.msra.mxu0 0.0
        %1063 = vmatpush.msra.mxu0 0.0
        %1064 = vmatpush.msra.mxu0 0.0
        %1065 = vmatpush.msra.mxu0 0.0
        %1066 = vmatpush.msra.mxu0 0.0
        %1067 = vmatpush.msra.mxu0 0.0
        %1068 = vmatpush.msra.mxu0 0.0
        %1069 = vmatpush.msra.mxu0 0.0
        %1070 = vmatpush.msra.mxu0 0.0
        %1071 = vmatpush.msra.mxu0 0.0
        %1072 = vmatpush.msra.mxu0 0.0
        %1073 = vmatpush.msra.mxu0 0.0
        %1074 = vmatpush.msra.mxu0 0.0
        %1075 = vmatpush.msra.mxu0 0.0
        %1076 = vmatpush.msra.mxu0 %v1060
        %1077 = vmatpush.msra.mxu0 %v1053
        %1078 = vmatmul.f32.gmra.mxu0 %v1058
        %v1079 = vpop.f32.mrf.mxu0
        %v1080 = vadd.f32 0.0, %v1079
        %1081 = vdwg.mxu0
        %v1082 = vmul.f32 %v1080, %v1050
        %v1084 = vsel %vm940, %v1082, 0
        %1086 = vmatpush.msra.mxu0 0.0
        %1087 = vmatpush.msra.mxu0 0.0
        %1088 = vmatpush.msra.mxu0 0.0
        %1089 = vmatpush.msra.mxu0 0.0
        %1090 = vmatpush.msra.mxu0 0.0
        %1091 = vmatpush.msra.mxu0 0.0
        %1092 = vmatpush.msra.mxu0 0.0
        %1093 = vmatpush.msra.mxu0 0.0
        %1094 = vmatpush.msra.mxu0 0.0
        %1095 = vmatpush.msra.mxu0 0.0
        %1096 = vmatpush.msra.mxu0 0.0
        %1097 = vmatpush.msra.mxu0 0.0
        %1098 = vmatpush.msra.mxu0 0.0
        %1099 = vmatpush.msra.mxu0 0.0
        %1100 = vmatpush.msra.mxu0 0.0
        %1101 = vmatpush.msra.mxu0 %v937
        %1102 = vmatmul.f32.gmra.mxu0 %v1084
        %v1103 = vpop.f32.mrf.mxu0
        %v1104 = vadd.f32 0.0, %v1103
        %1105 = vdwg.mxu0
        %v1107 = vsel %vm940, %v1008, 0
        %1109 = vmatpush.msra.mxu0 0.0
        %1110 = vmatpush.msra.mxu0 0.0
        %1111 = vmatpush.msra.mxu0 0.0
        %1112 = vmatpush.msra.mxu0 0.0
        %1113 = vmatpush.msra.mxu0 0.0
        %1114 = vmatpush.msra.mxu0 0.0
        %1115 = vmatpush.msra.mxu0 0.0
        %1116 = vmatpush.msra.mxu0 0.0
        %1117 = vmatpush.msra.mxu0 0.0
        %1118 = vmatpush.msra.mxu0 0.0
        %1119 = vmatpush.msra.mxu0 0.0
        %1120 = vmatpush.msra.mxu0 0.0
        %1121 = vmatpush.msra.mxu0 0.0
        %1122 = vmatpush.msra.mxu0 0.0
        %1123 = vmatpush.msra.mxu0 0.0
        %1124 = vmatpush.msra.mxu0 %v936
        %1125 = vmatmul.f32.gmra.mxu0 %v1107
        %v1126 = vpop.f32.mrf.mxu0
        %v1127 = vadd.f32 %v1104, %v1126
        %1128 = vdwg.mxu0
        %1129 = vrot.lane.b32.xlu0 %v825, 112
        %v1130 = vpop.permute.xlu0 %1129
        %1131 = vrot.lane.b32.xlu0 %v930, 112
        %v1132 = vpop.permute.xlu0 %1131
        %1133 = vrot.lane.b32.xlu0 %v931, 112
        %v1134 = vpop.permute.xlu0 %1133
        %v1135 = vsel %vm940, %v1130, 0
        %v1137 = vsel %vm940, %v1132, 0
        %v1139 = vsel %vm940, %v1134, 0
        %1141 = vmatpush.xpose.msra.mxu0 0.0
        %1142 = vmatpush.xpose.msra.mxu0 0.0
        %1143 = vmatpush.xpose.msra.mxu0 0.0
        %1144 = vmatpush.xpose.msra.mxu0 0.0
        %1145 = vmatpush.xpose.msra.mxu0 0.0
        %1146 = vmatpush.xpose.msra.mxu0 0.0
        %1147 = vmatpush.xpose.msra.mxu0 0.0
        %1148 = vmatpush.xpose.msra.mxu0 0.0
        %1149 = vmatpush.xpose.msra.mxu0 0.0
        %1150 = vmatpush.xpose.msra.mxu0 0.0
        %1151 = vmatpush.xpose.msra.mxu0 0.0
        %1152 = vmatpush.xpose.msra.mxu0 0.0
        %1153 = vmatpush.xpose.msra.mxu0 0.0
        %1154 = vmatpush.xpose.msra.mxu0 0.0
        %1155 = vmatpush.xpose.msra.mxu0 %v1139
        %1156 = vmatpush.xpose.msra.mxu0 %v1137
        %1157 = vmatmul.f32.gmra.mxu0 %v1135
        %v1158 = vpop.f32.mrf.mxu0
        %v1159 = vadd.f32 %v935, %v1158
        %1160 = vdwg.mxu0
        %v1161 = vsel %vm970, %v1159, -inf
        %1162 = vmax.xlane.f32.xlu0 %v1161
        %v1163 = vpop.xlane.xlu0 %1162
        %v1164 = vsub.f32 %v1159, %v1163
        %v1165 = vmul.f32 %v1164, 1.442695
        %v1166 = vpow.pop %v1165
        %v1167 = vsel %vm970, %v1166, 0.0
        %1168 = vadd.xlane.f32.xlu0 %v1167
        %v1169 = vpop.xlane.xlu0 %1168
        %v1170 = vrcp.pop %v1169
        %1171 = vrot.lane.b32.xlu0 %v932, 112
        %v1172 = vpop.permute.xlu0 %1171
        %1173 = vrot.lane.b32.xlu0 %v933, 112
        %v1174 = vpop.permute.xlu0 %1173
        %v1177 = vsel %vm970, %v1166, 0
        %v1179 = vsel %vm984, %v1174, 0
        %1181 = vmatpush.msra.mxu0 0.0
        %1182 = vmatpush.msra.mxu0 0.0
        %1183 = vmatpush.msra.mxu0 0.0
        %1184 = vmatpush.msra.mxu0 0.0
        %1185 = vmatpush.msra.mxu0 0.0
        %1186 = vmatpush.msra.mxu0 0.0
        %1187 = vmatpush.msra.mxu0 0.0
        %1188 = vmatpush.msra.mxu0 0.0
        %1189 = vmatpush.msra.mxu0 0.0
        %1190 = vmatpush.msra.mxu0 0.0
        %1191 = vmatpush.msra.mxu0 0.0
        %1192 = vmatpush.msra.mxu0 0.0
        %1193 = vmatpush.msra.mxu0 0.0
        %1194 = vmatpush.msra.mxu0 0.0
        %1195 = vmatpush.msra.mxu0 %v1179
        %1196 = vmatpush.msra.mxu0 %v1172
        %1197 = vmatmul.f32.gmra.mxu0 %v1177
        %v1198 = vpop.f32.mrf.mxu0
        %v1199 = vadd.f32 0.0, %v1198
        %1200 = vdwg.mxu0
        %v1201 = vmul.f32 %v1199, %v1170
        %v1203 = vsel %vm940, %v1201, 0
        %1205 = vmatpush.msra.mxu0 0.0
        %1206 = vmatpush.msra.mxu0 0.0
        %1207 = vmatpush.msra.mxu0 0.0
        %1208 = vmatpush.msra.mxu0 0.0
        %1209 = vmatpush.msra.mxu0 0.0
        %1210 = vmatpush.msra.mxu0 0.0
        %1211 = vmatpush.msra.mxu0 0.0
        %1212 = vmatpush.msra.mxu0 0.0
        %1213 = vmatpush.msra.mxu0 0.0
        %1214 = vmatpush.msra.mxu0 0.0
        %1215 = vmatpush.msra.mxu0 0.0
        %1216 = vmatpush.msra.mxu0 0.0
        %1217 = vmatpush.msra.mxu0 0.0
        %1218 = vmatpush.msra.mxu0 0.0
        %1219 = vmatpush.msra.mxu0 0.0
        %1220 = vmatpush.msra.mxu0 %v938
        %1221 = vmatmul.f32.gmra.mxu0 %v1203
        %v1222 = vpop.f32.mrf.mxu0
        %v1223 = vadd.f32 0.0, %v1222
        %1224 = vdwg.mxu0
        %v1225 = vadd.f32 %v1127, %v1223
        %1226 = vrot.lane.b32.xlu0 %v825, 104
        %v1227 = vpop.permute.xlu0 %1226
        %1228 = vrot.lane.b32.xlu0 %v930, 104
        %v1229 = vpop.permute.xlu0 %1228
        %1230 = vrot.lane.b32.xlu0 %v931, 104
        %v1231 = vpop.permute.xlu0 %1230
        %v1232 = vsel %vm940, %v1227, 0
        %v1234 = vsel %vm940, %v1229, 0
        %v1236 = vsel %vm940, %v1231, 0
        %1238 = vmatpush.xpose.msra.mxu0 0.0
        %1239 = vmatpush.xpose.msra.mxu0 0.0
        %1240 = vmatpush.xpose.msra.mxu0 0.0
        %1241 = vmatpush.xpose.msra.mxu0 0.0
        %1242 = vmatpush.xpose.msra.mxu0 0.0
        %1243 = vmatpush.xpose.msra.mxu0 0.0
        %1244 = vmatpush.xpose.msra.mxu0 0.0
        %1245 = vmatpush.xpose.msra.mxu0 0.0
        %1246 = vmatpush.xpose.msra.mxu0 0.0
        %1247 = vmatpush.xpose.msra.mxu0 0.0
        %1248 = vmatpush.xpose.msra.mxu0 0.0
        %1249 = vmatpush.xpose.msra.mxu0 0.0
        %1250 = vmatpush.xpose.msra.mxu0 0.0
        %1251 = vmatpush.xpose.msra.mxu0 0.0
        %1252 = vmatpush.xpose.msra.mxu0 %v1236
        %1253 = vmatpush.xpose.msra.mxu0 %v1234
        %1254 = vmatmul.f32.gmra.mxu0 %v1232
        %v1255 = vpop.f32.mrf.mxu0
        %v1256 = vadd.f32 %v935, %v1255
        %1257 = vdwg.mxu0
        %v1258 = vsel %vm970, %v1256, -inf
        %1259 = vmax.xlane.f32.xlu0 %v1258
        %v1260 = vpop.xlane.xlu0 %1259
        %v1261 = vsub.f32 %v1256, %v1260
        %v1262 = vmul.f32 %v1261, 1.442695
        %v1263 = vpow.pop %v1262
        %v1264 = vsel %vm970, %v1263, 0.0
        %1265 = vadd.xlane.f32.xlu0 %v1264
        %v1266 = vpop.xlane.xlu0 %1265
        %v1267 = vrcp.pop %v1266
        %1268 = vrot.lane.b32.xlu0 %v932, 104
        %v1269 = vpop.permute.xlu0 %1268
        %1270 = vrot.lane.b32.xlu0 %v933, 104
        %v1271 = vpop.permute.xlu0 %1270
        %v1274 = vsel %vm970, %v1263, 0
        %v1276 = vsel %vm984, %v1271, 0
        %1278 = vmatpush.msra.mxu0 0.0
        %1279 = vmatpush.msra.mxu0 0.0
        %1280 = vmatpush.msra.mxu0 0.0
        %1281 = vmatpush.msra.mxu0 0.0
        %1282 = vmatpush.msra.mxu0 0.0
        %1283 = vmatpush.msra.mxu0 0.0
        %1284 = vmatpush.msra.mxu0 0.0
        %1285 = vmatpush.msra.mxu0 0.0
        %1286 = vmatpush.msra.mxu0 0.0
        %1287 = vmatpush.msra.mxu0 0.0
        %1288 = vmatpush.msra.mxu0 0.0
        %1289 = vmatpush.msra.mxu0 0.0
        %1290 = vmatpush.msra.mxu0 0.0
        %1291 = vmatpush.msra.mxu0 0.0
        %1292 = vmatpush.msra.mxu0 %v1276
        %1293 = vmatpush.msra.mxu0 %v1269
        %1294 = vmatmul.f32.gmra.mxu0 %v1274
        %v1295 = vpop.f32.mrf.mxu0
        %v1296 = vadd.f32 0.0, %v1295
        %1297 = vdwg.mxu0
        %v1298 = vmul.f32 %v1296, %v1267
        %v1300 = vsel %vm940, %v1298, 0
        %1302 = vmatpush.msra.mxu0 0.0
        %1303 = vmatpush.msra.mxu0 0.0
        %1304 = vmatpush.msra.mxu0 0.0
        %1305 = vmatpush.msra.mxu0 0.0
        %1306 = vmatpush.msra.mxu0 0.0
        %1307 = vmatpush.msra.mxu0 0.0
        %1308 = vmatpush.msra.mxu0 0.0
        %1309 = vmatpush.msra.mxu0 0.0
        %1310 = vmatpush.msra.mxu0 0.0
        %1311 = vmatpush.msra.mxu0 0.0
        %1312 = vmatpush.msra.mxu0 0.0
        %1313 = vmatpush.msra.mxu0 0.0
        %1314 = vmatpush.msra.mxu0 0.0
        %1315 = vmatpush.msra.mxu0 0.0
        %1316 = vmatpush.msra.mxu0 0.0
        %1317 = vmatpush.msra.mxu0 %v939
        %1318 = vmatmul.f32.gmra.mxu0 %v1300
        %v1319 = vpop.f32.mrf.mxu0
        %v1320 = vadd.f32 0.0, %v1319
        %1321 = vdwg.mxu0
        %v1322 = vadd.f32 %v1225, %v1320
        %v1323 = vadd.f32 %v728, %v1322
        %v1324 = vld [vmem:[%s12] sm:$0x1]
        %v1326 = vperm.slane %v1324, 0
        %v1328 = vadd.f32 %v1323, %v1326
        %v1329 = vld [vmem:[%s13] sm:$0x1]
        %v1330 = vld [vmem:[%s14] sm:$0x1]
        %v1331 = vsel %vm733, %v1328, 0.0
        %1332 = vadd.xlane.f32.xlu0 %v1331
        %v1333 = vpop.xlane.xlu0 %1332
        %v1334 = vmul.f32 %v1333, %v743
        %v1335 = vsub.f32 %v1328, %v1334
        %v1336 = vmul.f32 %v1335, %v1335
        %v1337 = vsel %vm733, %v1336, 0.0
        %1338 = vadd.xlane.f32.xlu0 %v1337
        %v1339 = vpop.xlane.xlu0 %1338
        %v1340 = vmul.f32 %v1339, %v756
        %v1342 = vperm.slane %v1329, 0
        %v1344 = vmul.f32 %v1342, %v1335
        %v1345 = vrsqrt.pop %v1340
        %v1346 = vmul.f32 %v1345, %v1340
        %v1347 = vmul.f32 %v1346, %v1345
        %v1348 = vmul.f32 0.5, %v1347
        %v1349 = vsub.f32 1.5, %v1348
        %v1350 = vmul.f32 %v1345, %v1349
        %v1351 = vmul.f32 %v1340, %v1350
        %vm1352 = vcmp.eq.f32.partialorder %v1340, inf
        %v1353 = vsel %vm1352, %v1340, %v1351
        %vm1354 = vcmp.eq.f32.partialorder %v1340, 0.0
        %v1355 = vand.u32 %v1340, 2147483648
        %v1356 = vsel %vm1354, %v1355, %v1353
        %v1357 = vadd.f32 %v1356, 1e-06
        %v1358 = vrcp.pop %v1357
        %v1359 = vmul.f32 %v1357, %v1358
        %v1360 = vsub.f32 1.0, %v1359
        %v1361 = vmul.f32 %v1358, %v1360
        %v1362 = vadd.f32 %v1358, %v1361
        %vm1363 = vweird.f32 %v1357
        %vm1364 = vweird.f32 %v1358
        %vm1365 = vmor %vm1363, %vm1364
        %v1366 = vsel %vm1365, %v1358, %v1362
        %v1367 = vand.u32 2147483647, %v1357
        %vm1368 = vcmp.eq.f32.partialorder %v1367, 8.507059e+37
        %v1369 = vand.u32 %v1357, 2147483648
        %v1370 = vor.u32 1.1754944e-38, %v1369
        %v1371 = vsel %vm1368, %v1370, %v1366
        %v1372 = vmul.f32 %v1344, %v1371
        %v1374 = vperm.slane %v1330, 0
        %v1376 = vadd.f32 %v1372, %v1374
        %v1377 = vld [vmem:[#allocation12] sm:$0xff]
        %v1378 = vld [vmem:[#allocation12 + $0x8] sm:$0xff]
        %v1379 = vld [vmem:[#allocation12 + $0x10] sm:$0xff]
        %v1380 = vld [vmem:[#allocation12 + $0x18] sm:$0xff]
        %v1381 = vld [vmem:[%s16] sm:$0x1]
        %v1383 = vperm.slane %v1381, 0
        %v1386 = vsel %vm733, %v1376, 0
        %1388 = vmatpush.msra.mxu0 0.0
        %1389 = vmatpush.msra.mxu0 0.0
        %1390 = vmatpush.msra.mxu0 0.0
        %1391 = vmatpush.msra.mxu0 0.0
        %1392 = vmatpush.msra.mxu0 0.0
        %1393 = vmatpush.msra.mxu0 0.0
        %1394 = vmatpush.msra.mxu0 0.0
        %1395 = vmatpush.msra.mxu0 0.0
        %1396 = vmatpush.msra.mxu0 0.0
        %1397 = vmatpush.msra.mxu0 0.0
        %1398 = vmatpush.msra.mxu0 0.0
        %1399 = vmatpush.msra.mxu0 0.0
        %1400 = vmatpush.msra.mxu0 %v1380
        %1401 = vmatpush.msra.mxu0 %v1379
        %1402 = vmatpush.msra.mxu0 %v1378
        %1403 = vmatpush.msra.mxu0 %v1377
        %1404 = vmatmul.f32.gmra.mxu0 %v1386
        %v1405 = vpop.f32.mrf.mxu0
        %v1406 = vadd.f32 %v1383, %v1405
        %1407 = vdwg.mxu0
        %v1408 = vmax.f32 %v1406, 0.0
        %v1409 = vld [vmem:[%s17] sm:$0xff]
        %v1410 = vld [vmem:[%s17 + $0x8] sm:$0xff]
        %v1411 = vld [vmem:[%s17 + $0x10] sm:$0xff]
        %v1412 = vld [vmem:[%s17 + $0x18] sm:$0xff]
        %v1413 = vld [vmem:[%s17 + $0x20] sm:$0xff]
        %v1414 = vld [vmem:[%s17 + $0x28] sm:$0xff]
        %v1415 = vld [vmem:[%s17 + $0x30] sm:$0xff]
        %v1416 = vld [vmem:[%s17 + $0x38] sm:$0xff]
        %vm1417 = vcmask 523264
        %v1419 = vsel %vm1417, %v1408, 0
        %1421 = vmatpush.msra.mxu0 0.0
        %1422 = vmatpush.msra.mxu0 0.0
        %1423 = vmatpush.msra.mxu0 0.0
        %1424 = vmatpush.msra.mxu0 0.0
        %1425 = vmatpush.msra.mxu0 0.0
        %1426 = vmatpush.msra.mxu0 0.0
        %1427 = vmatpush.msra.mxu0 0.0
        %1428 = vmatpush.msra.mxu0 0.0
        %1429 = vmatpush.msra.mxu0 %v1416
        %1430 = vmatpush.msra.mxu0 %v1415
        %1431 = vmatpush.msra.mxu0 %v1414
        %1432 = vmatpush.msra.mxu0 %v1413
        %1433 = vmatpush.msra.mxu0 %v1412
        %1434 = vmatpush.msra.mxu0 %v1411
        %1435 = vmatpush.msra.mxu0 %v1410
        %1436 = vmatpush.msra.mxu0 %v1409
        %1437 = vmatmul.f32.gmra.mxu0 %v1419
        %v1438 = vpop.f32.mrf.mxu0
        %v1439 = vadd.f32 0.0, %v1438
        %1440 = vdwg.mxu0
        %v1441 = vadd.f32 %v1328, %v1439
        %v1442 = vld [vmem:[%s18] sm:$0x1]
        %v1444 = vperm.slane %v1442, 0
        %v1446 = vadd.f32 %v1441, %v1444
        %1447 = vst.msk [vmem:[%s727] sm:$0xff] %vm733, %v1446
        %s1448 = sand.u32 %s462, 1
        %s1449 = scalar_lea.sflag [#allocation6], %s1448
        %s1450 = sand.u32 %s462, 1
        %s1451 = smul.addr %s1450, 8
        %s1452 = scalar_lea.vmem [#allocation13], %s1451
        // Predicated region
        $region117: #{tpu_custom_call.1} parent=95 // pred_check
          %p1453 = pneg %p472
        $region118: #{tpu_custom_call.1} parent=95 // pred_check_branch
          %1455 = sbr.rel (%p1453) target = $region120
        $region119: #{tpu_custom_call.1} parent=95 // pred_region
          %1457 = vsyncadd %s1449, 0
          %s1458 = smul.addr %s40, 8
          %s1459 = scalar_lea.hbm %s19, %s1458
          %s1461 = sshll.u32 %s1452, 4
          %s1462 = int_to_ptr.vmem [resolvable:$true] %s1461
          %s1463 = sshll.u32 %s1459, 4
          %s1464 = int_to_ptr.hbm [resolvable:$true] %s1463
          %1466 = dma.vmem_to_hbm [thread:$0]  %s1462, 128, %s1464, %s1449
        $region120: #{tpu_custom_call.1} parent=95 // pred_fallthru
          _
      $region96: #{tpu_custom_call.1} parent=5 // pred_fallthru
        _
      %p1467 = scmp.le.s32.totalorder 2, %s35
      // Predicated region
      $region121: #{tpu_custom_call.1} parent=5 // pred_check
        %p1468 = pneg %p1467
      $region122: #{tpu_custom_call.1} parent=5 // pred_check_branch
        %1470 = sbr.rel (%p1468) target = $region124
      $region123: #{tpu_custom_call.1} parent=5 // pred_region
        %s1471 = ssub.s32 %s35, 2
        // Predicated region
        $region125: #{tpu_custom_call.1} parent=123 // pred_check
          %p1472 = pneg %p478
        $region126: #{tpu_custom_call.1} parent=123 // pred_check_branch
          %1474 = sbr.rel (%p1472) target = $region128
        $region127: #{tpu_custom_call.1} parent=123 // pred_region
          %s1475 = sand.u32 %s463, 1
          %s1476 = scalar_lea.sflag [#allocation6], %s1475
          %s1477 = sand.u32 %s463, 1
          %s1478 = smul.addr %s1477, 8
          %s1479 = scalar_lea.vmem [#allocation13], %s1478
          %1481 = dma.done %s1476, 128
        $region128: #{tpu_custom_call.1} parent=123 // pred_fallthru
          _
      $region124: #{tpu_custom_call.1} parent=5 // pred_fallthru
        _
    $region6: #{tpu_custom_call.1} parent=1 // loop_footer
      %s39 = sadd.s32 1, %s35
    $region7: #{tpu_custom_call.1} parent=1 // loop_footer_branch
      %34 = sbr.rel target = $region3
    $region8: #{tpu_custom_call.1} parent=1 // loop_exit
      _
    %1482 = vsyncpa [#allocation5], 1
    %s1483 = scalar_lea.sflag [#allocation5], 1
    %1484 = vsyncpa %s1483, 1
    %1485 = vsyncpa [#allocation8], 1
    %s1486 = scalar_lea.sflag [#allocation8], 1
    %1487 = vsyncpa %s1486, 1
    %1488 = vsyncpa [#allocation11], 1
    %1489 = vsyncpa [#allocation6], 1
    %s1490 = scalar_lea.sflag [#allocation6], 1
    %1491 = vsyncpa %s1490, 1

</llo_original>
